<compile_context>
chip_gen: v7x
topology: tpu7x:2x2x1
jax: 0.10.0
libtpu: 0.0.40
codegen_flags: <defaults>
</compile_context>

<pallas_src>
import functools

import jax
import jax.numpy as jnp
from jax.experimental import pallas as pl
from jax.experimental.pallas import tpu as pltpu

# ---- model hyper-parameters (small, consistent with the module) -------------
D_MODEL = 32
FFN_HIDDEN = 64
N_HEAD = 4
N_LAYERS = 2
EPS = 1e-5          # torch.nn.LayerNorm default eps

# row layout of the packed per-layer small-parameter slab (L, 8, 3*D_MODEL)
_ROW_BQKV = 0   # fused q/k/v bias, width 3D (q part pre-scaled by 1/sqrt(dh))
_ROW_B1 = 1     # ffn first bias,   width F   (zero padded)
_ROW_BO = 2     # attn out bias,    width D   (zero padded)
_ROW_B2 = 3     # ffn second bias,  width D
_ROW_G1 = 4     # norm1 gamma
_ROW_BE1 = 5    # norm1 beta
_ROW_G2 = 6     # norm2 gamma
_ROW_BE2 = 7    # norm2 beta


# ---- whole Encoder (all layers) for one batch element per grid step ---------
def encoder_kernel(x_ref, wqkv_ref, wo_ref, w1_ref, w2_ref, small_ref, o_ref,
                   *, n_head):
    S, D = x_ref.shape                       # one sequence: (S, D)
    n_layers = wqkv_ref.shape[0]
    F = w1_ref.shape[-1]
    dh = D // n_head

    x = x_ref[...].astype(jnp.float32)       # residual / norm math in f32

    # per-head lane masks, built once (layer-independent constants)
    lane = jax.lax.broadcasted_iota(jnp.int32, (1, D), 1)
    head_masks = [((lane >= h * dh) & (lane < (h + 1) * dh)).astype(jnp.float32)
                  for h in range(n_head)]

    def layer_norm(v, gamma, beta):
        mu = jnp.mean(v, axis=-1, keepdims=True)
        var = jnp.mean((v - mu) ** 2, axis=-1, keepdims=True)
        return (v - mu) * jax.lax.rsqrt(var + EPS) * gamma + beta

    for l in range(n_layers):
        wqkv = wqkv_ref[l]                                   # (D, 3D) bf16
        wo = wo_ref[l]                                       # (D, D)  bf16
        w1 = w1_ref[l]                                       # (D, F)  bf16
        w2 = w2_ref[l]                                       # (F, D)  bf16
        small = small_ref[l]                                 # (8, 3D) f32
        bqkv = small[_ROW_BQKV:_ROW_BQKV + 1, :]             # (1, 3D)
        b1 = small[_ROW_B1:_ROW_B1 + 1, :F]                  # (1, F)
        bo = small[_ROW_BO:_ROW_BO + 1, :D]                  # (1, D)
        b2 = small[_ROW_B2:_ROW_B2 + 1, :D]
        g1 = small[_ROW_G1:_ROW_G1 + 1, :D]
        be1 = small[_ROW_BE1:_ROW_BE1 + 1, :D]
        g2 = small[_ROW_G2:_ROW_G2 + 1, :D]
        be2 = small[_ROW_BE2:_ROW_BE2 + 1, :D]

        # ---- multi-head self attention (q = k = v = x) ----
        # Fused QKV projection; 1/sqrt(dh) is already folded into the Q block.
        qkv = jnp.dot(x.astype(jnp.bfloat16), wqkv,
                      preferred_element_type=jnp.float32) + bqkv   # (S, 3D) f32
        q = qkv[:, 0 * D:1 * D]
        k = qkv[:, 1 * D:2 * D]
        v = qkv[:, 2 * D:3 * D]

        # Head-packed Q: row h*S+i holds q[i] with lanes outside head h zeroed,
        # so ONE full-width QK^T produces every head's score block.
        q_blocks = jnp.concatenate([q * m for m in head_masks], axis=0)  # (H*S, D)

        s_big = jnp.einsum('td,jd->tj', q_blocks.astype(jnp.bfloat16),
                           k.astype(jnp.bfloat16),
                           preferred_element_type=jnp.float32)     # (H*S, S) f32

        # Standard (per-row) softmax in f32 — each row is exactly one head's
        # score vector, so no segmented reduction is needed.
        s_big = s_big - jnp.max(s_big, axis=-1, keepdims=True)
        p_big = jnp.exp(s_big)
        p_big = p_big * pl.reciprocal(jnp.sum(p_big, axis=-1, keepdims=True),
                                      approx=True)

        # One PV matmul for all heads, then recover the concatenated multi-head
        # context with aligned sublane slices + lane masks (VPU only).
        ctx_big = jnp.dot(p_big.astype(jnp.bfloat16), v.astype(jnp.bfloat16),
                          preferred_element_type=jnp.float32)      # (H*S, D)
        ctx = jnp.zeros((S, D), jnp.float32)
        for h in range(n_head):
            ctx = ctx + ctx_big[h * S:(h + 1) * S, :] * head_masks[h]

        attn = jnp.dot(ctx.astype(jnp.bfloat16), wo,
                       preferred_element_type=jnp.float32) + bo

        # dropout1 is identity (eval mode); residual + norm1
        x1 = layer_norm(attn + x, g1, be1)

        # ---- position-wise feed-forward (kan=False path) ----
        h1 = jnp.maximum(
            jnp.dot(x1.astype(jnp.bfloat16), w1,
                    preferred_element_type=jnp.float32) + b1, 0.0)
        ffn = jnp.dot(h1.astype(jnp.bfloat16), w2,
                      preferred_element_type=jnp.float32) + b2

        # dropout2 is identity (eval mode); residual + norm2
        x = layer_norm(ffn + x1, g2, be2)

    o_ref[...] = x.astype(o_ref.dtype)


def _const_spec(a):
    nd = a.ndim
    return pl.BlockSpec(a.shape, lambda i, _nd=nd: (0,) * _nd)


def encoder_forward(x, packed_params):
    """Run the whole Encoder (all layers) in a single pallas_call.

    x: (B, S, D).  packed_params: (wqkv, wo, w1, w2, small) stacked over layers.
    Grid is over the batch axis; weights stay resident in VMEM across steps.
    """
    B, S, D = x.shape
    x2 = x.reshape(B * S, D)                      # token-major activations
    wqkv, wo, w1, w2, small = packed_params

    kernel = functools.partial(encoder_kernel, n_head=N_HEAD)
    out2 = pl.pallas_call(
        kernel,
        grid=(B,),
        in_specs=[pl.BlockSpec((S, D), lambda i: (i, 0))] +
                 [_const_spec(a) for a in (wqkv, wo, w1, w2, small)],
        out_specs=pl.BlockSpec((S, D), lambda i: (i, 0)),
        out_shape=jax.ShapeDtypeStruct((B * S, D), x.dtype),
        compiler_params=pltpu.CompilerParams(
            dimension_semantics=("parallel",)),
    )(x2, wqkv, wo, w1, w2, small)
    return out2.reshape(B, S, D)


# ---- deterministic parameter initialization & packing ------------------------
def init_layer_params(key, d_model, ffn_hidden):
    ks = jax.random.split(key, 6)

    def lin(k, din, dout):
        w = (jax.random.normal(k, (din, dout), jnp.float32)
             * (1.0 / jnp.sqrt(jnp.float32(din))))
        b = jnp.zeros((dout,), jnp.float32)
        return w, b

    wq, bq = lin(ks[0], d_model, d_model)
    wk, bk = lin(ks[1], d_model, d_model)
    wv, bv = lin(ks[2], d_model, d_model)
    wo, bo = lin(ks[3], d_model, d_model)
    w1, b1 = lin(ks[4], d_model, ffn_hidden)
    w2, b2 = lin(ks[5], ffn_hidden, d_model)
    return dict(wq=wq, bq=bq, wk=wk, bk=bk, wv=wv, bv=bv, wo=wo, bo=bo,
                w1=w1, b1=b1, w2=w2, b2=b2,
                g1=jnp.ones((d_model,), jnp.float32),
                be1=jnp.zeros((d_model,), jnp.float32),
                g2=jnp.ones((d_model,), jnp.float32),
                be2=jnp.zeros((d_model,), jnp.float32))


def pack_params(layer_params, d_model, ffn_hidden, n_head):
    """Stack per-layer params into the fused-kernel layout (weights -> bf16)."""
    D, F = d_model, ffn_hidden
    assert F <= 3 * D, "small-param slab width assumes ffn_hidden <= 3*d_model"
    width = 3 * D
    dh = D // n_head
    scale = 1.0 / jnp.sqrt(jnp.float32(dh))   # folded into Q projection

    def pad(v):
        return jnp.pad(v, (0, width - v.shape[0]))

    wqkv, wo, w1, w2, small = [], [], [], [], []
    for p in layer_params:
        wq = p['wq'] * scale
        bq = p['bq'] * scale
        wqkv.append(jnp.concatenate([wq, p['wk'], p['wv']],
                                    axis=1).astype(jnp.bfloat16))      # (D, 3D)
        wo.append(p['wo'].astype(jnp.bfloat16))
        w1.append(p['w1'].astype(jnp.bfloat16))
        w2.append(p['w2'].astype(jnp.bfloat16))
        bqkv = jnp.concatenate([bq, p['bk'], p['bv']])                 # (3D,)
        rows = [bqkv, pad(p['b1']), pad(p['bo']), pad(p['b2']),
                pad(p['g1']), pad(p['be1']), pad(p['g2']), pad(p['be2'])]
        small.append(jnp.stack(rows, axis=0).astype(jnp.float32))      # (8, 3D)

    stack = lambda xs: jnp.stack(xs, axis=0)
    return (stack(wqkv), stack(wo), stack(w1), stack(w2), stack(small))


if __name__ == "__main__":
    B, S = 2, 8
    key = jax.random.PRNGKey(0)
    kx, kp = jax.random.split(key)

    x = jax.random.normal(kx, (B, S, D_MODEL), jnp.float32)
    layer_keys = jax.random.split(kp, N_LAYERS)
    layer_params = [init_layer_params(k, D_MODEL, FFN_HIDDEN)
                    for k in layer_keys]
    packed = pack_params(layer_params, D_MODEL, FFN_HIDDEN, N_HEAD)

    out = jax.jit(lambda xx: encoder_forward(xx, packed))(x)
    out = jax.block_until_ready(out)
    assert out.shape == (B, S, D_MODEL)
    assert bool(jnp.all(jnp.isfinite(out)))
    print("KERNEL_OK")
</pallas_src>

<mosaic_0001>
module attributes {stable_mosaic.version = 11 : i64} {
  func.func @encoder_kernel(%arg0: i32, %arg1: memref<8x32xf32, #tpu.memory_space<vmem>>, %arg2: memref<2x32x96xbf16, #tpu.memory_space<vmem>>, %arg3: memref<2x32x32xbf16, #tpu.memory_space<vmem>>, %arg4: memref<2x32x64xbf16, #tpu.memory_space<vmem>>, %arg5: memref<2x64x32xbf16, #tpu.memory_space<vmem>>, %arg6: memref<2x8x96xf32, #tpu.memory_space<vmem>>, %arg7: memref<8x32xf32, #tpu.memory_space<vmem>>) attributes {dimension_semantics = [#tpu.dimension_semantics<parallel>], iteration_bounds = array<i64: 2>, scalar_prefetch = 0 : i64, scratch_operands = 0 : i64, tpu.core_type = #tpu.core_type<tc>, window_params = [{transform_indices = @transform_0, window_bounds = array<i64: 8, 32>}, {pipeline_mode = #tpu.pipeline_mode<synchronous>, transform_indices = @transform_1, window_bounds = array<i64: 2, 32, 96>}, {pipeline_mode = #tpu.pipeline_mode<synchronous>, transform_indices = @transform_2, window_bounds = array<i64: 2, 32, 32>}, {pipeline_mode = #tpu.pipeline_mode<synchronous>, transform_indices = @transform_3, window_bounds = array<i64: 2, 32, 64>}, {pipeline_mode = #tpu.pipeline_mode<synchronous>, transform_indices = @transform_4, window_bounds = array<i64: 2, 64, 32>}, {pipeline_mode = #tpu.pipeline_mode<synchronous>, transform_indices = @transform_5, window_bounds = array<i64: 2, 8, 96>}, {transform_indices = @transform_6, window_bounds = array<i64: 8, 32>}]} {
    %c0 = arith.constant 0 : index
    %c0_0 = arith.constant 0 : index
    %0 = vector.load %arg1[%c0, %c0_0] : memref<8x32xf32, #tpu.memory_space<vmem>>, vector<8x32xf32>
    %1 = tpu.iota {dimensions = array<i32: 1>} : vector<1x32xi32>
    %c0_i32 = arith.constant 0 : i32
    %2 = vector.broadcast %c0_i32 : i32 to vector<1x32xi32>
    %3 = arith.cmpi sge, %1, %2 : vector<1x32xi32>
    %c8_i32 = arith.constant 8 : i32
    %4 = vector.broadcast %c8_i32 : i32 to vector<1x32xi32>
    %5 = arith.cmpi slt, %1, %4 : vector<1x32xi32>
    %6 = arith.andi %3, %5 : vector<1x32xi1>
    %7 = arith.extui %6 : vector<1x32xi1> to vector<1x32xi32>
    %8 = arith.sitofp %7 : vector<1x32xi32> to vector<1x32xf32>
    %c8_i32_1 = arith.constant 8 : i32
    %9 = vector.broadcast %c8_i32_1 : i32 to vector<1x32xi32>
    %10 = arith.cmpi sge, %1, %9 : vector<1x32xi32>
    %c16_i32 = arith.constant 16 : i32
    %11 = vector.broadcast %c16_i32 : i32 to vector<1x32xi32>
    %12 = arith.cmpi slt, %1, %11 : vector<1x32xi32>
    %13 = arith.andi %10, %12 : vector<1x32xi1>
    %14 = arith.extui %13 : vector<1x32xi1> to vector<1x32xi32>
    %15 = arith.sitofp %14 : vector<1x32xi32> to vector<1x32xf32>
    %c16_i32_2 = arith.constant 16 : i32
    %16 = vector.broadcast %c16_i32_2 : i32 to vector<1x32xi32>
    %17 = arith.cmpi sge, %1, %16 : vector<1x32xi32>
    %c24_i32 = arith.constant 24 : i32
    %18 = vector.broadcast %c24_i32 : i32 to vector<1x32xi32>
    %19 = arith.cmpi slt, %1, %18 : vector<1x32xi32>
    %20 = arith.andi %17, %19 : vector<1x32xi1>
    %21 = arith.extui %20 : vector<1x32xi1> to vector<1x32xi32>
    %22 = arith.sitofp %21 : vector<1x32xi32> to vector<1x32xf32>
    %c24_i32_3 = arith.constant 24 : i32
    %23 = vector.broadcast %c24_i32_3 : i32 to vector<1x32xi32>
    %24 = arith.cmpi sge, %1, %23 : vector<1x32xi32>
    %c32_i32 = arith.constant 32 : i32
    %25 = vector.broadcast %c32_i32 : i32 to vector<1x32xi32>
    %26 = arith.cmpi slt, %1, %25 : vector<1x32xi32>
    %27 = arith.andi %24, %26 : vector<1x32xi1>
    %28 = arith.extui %27 : vector<1x32xi1> to vector<1x32xi32>
    %29 = arith.sitofp %28 : vector<1x32xi32> to vector<1x32xf32>
    %c0_4 = arith.constant 0 : index
    %c0_5 = arith.constant 0 : index
    %c0_6 = arith.constant 0 : index
    %30 = vector.load %arg2[%c0_4, %c0_5, %c0_6] : memref<2x32x96xbf16, #tpu.memory_space<vmem>>, vector<1x32x96xbf16>
    %31 = vector.shape_cast %30 : vector<1x32x96xbf16> to vector<32x96xbf16>
    %c0_7 = arith.constant 0 : index
    %c0_8 = arith.constant 0 : index
    %c0_9 = arith.constant 0 : index
    %32 = vector.load %arg3[%c0_7, %c0_8, %c0_9] : memref<2x32x32xbf16, #tpu.memory_space<vmem>>, vector<1x32x32xbf16>
    %33 = vector.shape_cast %32 : vector<1x32x32xbf16> to vector<32x32xbf16>
    %c0_10 = arith.constant 0 : index
    %c0_11 = arith.constant 0 : index
    %c0_12 = arith.constant 0 : index
    %34 = vector.load %arg4[%c0_10, %c0_11, %c0_12] : memref<2x32x64xbf16, #tpu.memory_space<vmem>>, vector<1x32x64xbf16>
    %35 = vector.shape_cast %34 : vector<1x32x64xbf16> to vector<32x64xbf16>
    %c0_13 = arith.constant 0 : index
    %c0_14 = arith.constant 0 : index
    %c0_15 = arith.constant 0 : index
    %36 = vector.load %arg5[%c0_13, %c0_14, %c0_15] : memref<2x64x32xbf16, #tpu.memory_space<vmem>>, vector<1x64x32xbf16>
    %37 = vector.shape_cast %36 : vector<1x64x32xbf16> to vector<64x32xbf16>
    %c0_16 = arith.constant 0 : index
    %c0_17 = arith.constant 0 : index
    %c0_18 = arith.constant 0 : index
    %38 = vector.load %arg6[%c0_16, %c0_17, %c0_18] : memref<2x8x96xf32, #tpu.memory_space<vmem>>, vector<1x8x96xf32>
    %39 = vector.shape_cast %38 : vector<1x8x96xf32> to vector<8x96xf32>
    %40 = vector.extract_strided_slice %39 {offsets = [0, 0], sizes = [1, 96], strides = [1, 1]} : vector<8x96xf32> to vector<1x96xf32>
    %41 = vector.extract_strided_slice %39 {offsets = [1, 0], sizes = [1, 64], strides = [1, 1]} : vector<8x96xf32> to vector<1x64xf32>
    %42 = vector.extract_strided_slice %39 {offsets = [2, 0], sizes = [1, 32], strides = [1, 1]} : vector<8x96xf32> to vector<1x32xf32>
    %43 = vector.extract_strided_slice %39 {offsets = [3, 0], sizes = [1, 32], strides = [1, 1]} : vector<8x96xf32> to vector<1x32xf32>
    %44 = vector.extract_strided_slice %39 {offsets = [4, 0], sizes = [1, 32], strides = [1, 1]} : vector<8x96xf32> to vector<1x32xf32>
    %45 = vector.extract_strided_slice %39 {offsets = [5, 0], sizes = [1, 32], strides = [1, 1]} : vector<8x96xf32> to vector<1x32xf32>
    %46 = vector.extract_strided_slice %39 {offsets = [6, 0], sizes = [1, 32], strides = [1, 1]} : vector<8x96xf32> to vector<1x32xf32>
    %47 = vector.extract_strided_slice %39 {offsets = [7, 0], sizes = [1, 32], strides = [1, 1]} : vector<8x96xf32> to vector<1x32xf32>
    %48 = arith.truncf %0 : vector<8x32xf32> to vector<8x32xbf16>
    %cst = arith.constant dense<0.000000e+00> : vector<8x96xf32>
    %49 = tpu.matmul %48, %31, %cst {dimension_numbers = #tpu.dot_dimension_numbers<[1], [0], [0], [1], [0, 0, 1, 1], [], []>} : vector<8x32xbf16>, vector<32x96xbf16>, vector<8x96xf32> -> vector<8x96xf32>
    %50 = vector.broadcast %40 : vector<1x96xf32> to vector<8x96xf32>
    %51 = arith.addf %49, %50 : vector<8x96xf32>
    %52 = vector.extract_strided_slice %51 {offsets = [0, 0], sizes = [8, 32], strides = [1, 1]} : vector<8x96xf32> to vector<8x32xf32>
    %53 = vector.extract_strided_slice %51 {offsets = [0, 32], sizes = [8, 32], strides = [1, 1]} : vector<8x96xf32> to vector<8x32xf32>
    %54 = vector.extract_strided_slice %51 {offsets = [0, 64], sizes = [8, 32], strides = [1, 1]} : vector<8x96xf32> to vector<8x32xf32>
    %55 = vector.broadcast %8 : vector<1x32xf32> to vector<8x32xf32>
    %56 = arith.mulf %52, %55 : vector<8x32xf32>
    %57 = vector.broadcast %15 : vector<1x32xf32> to vector<8x32xf32>
    %58 = arith.mulf %52, %57 : vector<8x32xf32>
    %59 = vector.broadcast %22 : vector<1x32xf32> to vector<8x32xf32>
    %60 = arith.mulf %52, %59 : vector<8x32xf32>
    %61 = vector.broadcast %29 : vector<1x32xf32> to vector<8x32xf32>
    %62 = arith.mulf %52, %61 : vector<8x32xf32>
    %63 = tpu.concatenate %56, %58, %60, %62 in 0 : vector<8x32xf32>, vector<8x32xf32>, vector<8x32xf32>, vector<8x32xf32> -> vector<32x32xf32>
    %64 = arith.truncf %63 : vector<32x32xf32> to vector<32x32xbf16>
    %65 = arith.truncf %53 : vector<8x32xf32> to vector<8x32xbf16>
    "tpu.trace_start"() <{level = 10 : i32, message = "td,jd->tj"}> : () -> ()
    %cst_19 = arith.constant dense<0.000000e+00> : vector<32x8xf32>
    %66 = tpu.matmul %64, %65, %cst_19 {dimension_numbers = #tpu.dot_dimension_numbers<[1], [1], [0], [0], [0, 0, 1, 0], [], []>} : vector<32x32xbf16>, vector<8x32xbf16>, vector<32x8xf32> -> vector<32x8xf32>
    "tpu.trace_stop"() : () -> ()
    %cst_20 = arith.constant dense<0xFF800000> : vector<32xf32>
    %67 = vector.multi_reduction <maximumf>, %66, %cst_20 [1] : vector<32x8xf32> to vector<32xf32>
    %68 = vector.shape_cast %67 : vector<32xf32> to vector<32x1xf32>
    %69 = vector.broadcast %68 : vector<32x1xf32> to vector<32x8xf32>
    %70 = arith.subf %66, %69 : vector<32x8xf32>
    %71 = math.exp %70 : vector<32x8xf32>
    %cst_21 = arith.constant dense<0.000000e+00> : vector<32xf32>
    %72 = vector.multi_reduction <add>, %71, %cst_21 [1] : vector<32x8xf32> to vector<32xf32>
    %73 = vector.shape_cast %72 : vector<32xf32> to vector<32x1xf32>
    %74 = tpu.reciprocal %73 {approx = true} : vector<32x1xf32> -> vector<32x1xf32>
    %75 = vector.broadcast %74 : vector<32x1xf32> to vector<32x8xf32>
    %76 = arith.mulf %71, %75 : vector<32x8xf32>
    %77 = arith.truncf %76 : vector<32x8xf32> to vector<32x8xbf16>
    %78 = arith.truncf %54 : vector<8x32xf32> to vector<8x32xbf16>
    %cst_22 = arith.constant dense<0.000000e+00> : vector<32x32xf32>
    %79 = tpu.matmul %77, %78, %cst_22 {dimension_numbers = #tpu.dot_dimension_numbers<[1], [0], [0], [1], [0, 0, 1, 1], [], []>} : vector<32x8xbf16>, vector<8x32xbf16>, vector<32x32xf32> -> vector<32x32xf32>
    %cst_23 = arith.constant 0.000000e+00 : f32
    %80 = vector.broadcast %cst_23 : f32 to vector<8x32xf32>
    %81 = vector.extract_strided_slice %79 {offsets = [0, 0], sizes = [8, 32], strides = [1, 1]} : vector<32x32xf32> to vector<8x32xf32>
    %82 = vector.broadcast %8 : vector<1x32xf32> to vector<8x32xf32>
    %83 = arith.mulf %81, %82 : vector<8x32xf32>
    %84 = arith.addf %80, %83 : vector<8x32xf32>
    %85 = vector.extract_strided_slice %79 {offsets = [8, 0], sizes = [8, 32], strides = [1, 1]} : vector<32x32xf32> to vector<8x32xf32>
    %86 = vector.broadcast %15 : vector<1x32xf32> to vector<8x32xf32>
    %87 = arith.mulf %85, %86 : vector<8x32xf32>
    %88 = arith.addf %84, %87 : vector<8x32xf32>
    %89 = vector.extract_strided_slice %79 {offsets = [16, 0], sizes = [8, 32], strides = [1, 1]} : vector<32x32xf32> to vector<8x32xf32>
    %90 = vector.broadcast %22 : vector<1x32xf32> to vector<8x32xf32>
    %91 = arith.mulf %89, %90 : vector<8x32xf32>
    %92 = arith.addf %88, %91 : vector<8x32xf32>
    %93 = vector.extract_strided_slice %79 {offsets = [24, 0], sizes = [8, 32], strides = [1, 1]} : vector<32x32xf32> to vector<8x32xf32>
    %94 = vector.broadcast %29 : vector<1x32xf32> to vector<8x32xf32>
    %95 = arith.mulf %93, %94 : vector<8x32xf32>
    %96 = arith.addf %92, %95 : vector<8x32xf32>
    %97 = arith.truncf %96 : vector<8x32xf32> to vector<8x32xbf16>
    %cst_24 = arith.constant dense<0.000000e+00> : vector<8x32xf32>
    %98 = tpu.matmul %97, %33, %cst_24 {dimension_numbers = #tpu.dot_dimension_numbers<[1], [0], [0], [1], [0, 0, 1, 1], [], []>} : vector<8x32xbf16>, vector<32x32xbf16>, vector<8x32xf32> -> vector<8x32xf32>
    %99 = vector.broadcast %42 : vector<1x32xf32> to vector<8x32xf32>
    %100 = arith.addf %98, %99 : vector<8x32xf32>
    %101 = arith.addf %100, %0 : vector<8x32xf32>
    %cst_25 = arith.constant dense<0.000000e+00> : vector<8xf32>
    %102 = vector.multi_reduction <add>, %101, %cst_25 [1] : vector<8x32xf32> to vector<8xf32>
    %103 = vector.shape_cast %102 : vector<8xf32> to vector<8x1xf32>
    %cst_26 = arith.constant 3.200000e+01 : f32
    %104 = vector.broadcast %cst_26 : f32 to vector<8x1xf32>
    %105 = arith.divf %103, %104 : vector<8x1xf32>
    %106 = vector.broadcast %105 : vector<8x1xf32> to vector<8x32xf32>
    %107 = arith.subf %101, %106 : vector<8x32xf32>
    %108 = arith.mulf %107, %107 : vector<8x32xf32>
    %cst_27 = arith.constant dense<0.000000e+00> : vector<8xf32>
    %109 = vector.multi_reduction <add>, %108, %cst_27 [1] : vector<8x32xf32> to vector<8xf32>
    %110 = vector.shape_cast %109 : vector<8xf32> to vector<8x1xf32>
    %cst_28 = arith.constant 3.200000e+01 : f32
    %111 = vector.broadcast %cst_28 : f32 to vector<8x1xf32>
    %112 = arith.divf %110, %111 : vector<8x1xf32>
    %113 = vector.broadcast %105 : vector<8x1xf32> to vector<8x32xf32>
    %114 = arith.subf %101, %113 : vector<8x32xf32>
    %cst_29 = arith.constant 9.99999974E-6 : f32
    %115 = vector.broadcast %cst_29 : f32 to vector<8x1xf32>
    %116 = arith.addf %112, %115 : vector<8x1xf32>
    %117 = math.rsqrt %116 : vector<8x1xf32>
    %118 = vector.broadcast %117 : vector<8x1xf32> to vector<8x32xf32>
    %119 = arith.mulf %114, %118 : vector<8x32xf32>
    %120 = vector.broadcast %44 : vector<1x32xf32> to vector<8x32xf32>
    %121 = arith.mulf %119, %120 : vector<8x32xf32>
    %122 = vector.broadcast %45 : vector<1x32xf32> to vector<8x32xf32>
    %123 = arith.addf %121, %122 : vector<8x32xf32>
    %124 = arith.truncf %123 : vector<8x32xf32> to vector<8x32xbf16>
    %cst_30 = arith.constant dense<0.000000e+00> : vector<8x64xf32>
    %125 = tpu.matmul %124, %35, %cst_30 {dimension_numbers = #tpu.dot_dimension_numbers<[1], [0], [0], [1], [0, 0, 1, 1], [], []>} : vector<8x32xbf16>, vector<32x64xbf16>, vector<8x64xf32> -> vector<8x64xf32>
    %126 = vector.broadcast %41 : vector<1x64xf32> to vector<8x64xf32>
    %127 = arith.addf %125, %126 : vector<8x64xf32>
    %cst_31 = arith.constant 0.000000e+00 : f32
    %128 = vector.broadcast %cst_31 : f32 to vector<8x64xf32>
    %129 = arith.maximumf %127, %128 : vector<8x64xf32>
    %130 = arith.truncf %129 : vector<8x64xf32> to vector<8x64xbf16>
    %cst_32 = arith.constant dense<0.000000e+00> : vector<8x32xf32>
    %131 = tpu.matmul %130, %37, %cst_32 {dimension_numbers = #tpu.dot_dimension_numbers<[1], [0], [0], [1], [0, 0, 1, 1], [], []>} : vector<8x64xbf16>, vector<64x32xbf16>, vector<8x32xf32> -> vector<8x32xf32>
    %132 = vector.broadcast %43 : vector<1x32xf32> to vector<8x32xf32>
    %133 = arith.addf %131, %132 : vector<8x32xf32>
    %134 = arith.addf %133, %123 : vector<8x32xf32>
    %cst_33 = arith.constant dense<0.000000e+00> : vector<8xf32>
    %135 = vector.multi_reduction <add>, %134, %cst_33 [1] : vector<8x32xf32> to vector<8xf32>
    %136 = vector.shape_cast %135 : vector<8xf32> to vector<8x1xf32>
    %cst_34 = arith.constant 3.200000e+01 : f32
    %137 = vector.broadcast %cst_34 : f32 to vector<8x1xf32>
    %138 = arith.divf %136, %137 : vector<8x1xf32>
    %139 = vector.broadcast %138 : vector<8x1xf32> to vector<8x32xf32>
    %140 = arith.subf %134, %139 : vector<8x32xf32>
    %141 = arith.mulf %140, %140 : vector<8x32xf32>
    %cst_35 = arith.constant dense<0.000000e+00> : vector<8xf32>
    %142 = vector.multi_reduction <add>, %141, %cst_35 [1] : vector<8x32xf32> to vector<8xf32>
    %143 = vector.shape_cast %142 : vector<8xf32> to vector<8x1xf32>
    %cst_36 = arith.constant 3.200000e+01 : f32
    %144 = vector.broadcast %cst_36 : f32 to vector<8x1xf32>
    %145 = arith.divf %143, %144 : vector<8x1xf32>
    %146 = vector.broadcast %138 : vector<8x1xf32> to vector<8x32xf32>
    %147 = arith.subf %134, %146 : vector<8x32xf32>
    %cst_37 = arith.constant 9.99999974E-6 : f32
    %148 = vector.broadcast %cst_37 : f32 to vector<8x1xf32>
    %149 = arith.addf %145, %148 : vector<8x1xf32>
    %150 = math.rsqrt %149 : vector<8x1xf32>
    %151 = vector.broadcast %150 : vector<8x1xf32> to vector<8x32xf32>
    %152 = arith.mulf %147, %151 : vector<8x32xf32>
    %153 = vector.broadcast %46 : vector<1x32xf32> to vector<8x32xf32>
    %154 = arith.mulf %152, %153 : vector<8x32xf32>
    %155 = vector.broadcast %47 : vector<1x32xf32> to vector<8x32xf32>
    %156 = arith.addf %154, %155 : vector<8x32xf32>
    %c1 = arith.constant 1 : index
    %c0_38 = arith.constant 0 : index
    %c0_39 = arith.constant 0 : index
    %157 = vector.load %arg2[%c1, %c0_38, %c0_39] : memref<2x32x96xbf16, #tpu.memory_space<vmem>>, vector<1x32x96xbf16>
    %158 = vector.shape_cast %157 : vector<1x32x96xbf16> to vector<32x96xbf16>
    %c1_40 = arith.constant 1 : index
    %c0_41 = arith.constant 0 : index
    %c0_42 = arith.constant 0 : index
    %159 = vector.load %arg3[%c1_40, %c0_41, %c0_42] : memref<2x32x32xbf16, #tpu.memory_space<vmem>>, vector<1x32x32xbf16>
    %160 = vector.shape_cast %159 : vector<1x32x32xbf16> to vector<32x32xbf16>
    %c1_43 = arith.constant 1 : index
    %c0_44 = arith.constant 0 : index
    %c0_45 = arith.constant 0 : index
    %161 = vector.load %arg4[%c1_43, %c0_44, %c0_45] : memref<2x32x64xbf16, #tpu.memory_space<vmem>>, vector<1x32x64xbf16>
    %162 = vector.shape_cast %161 : vector<1x32x64xbf16> to vector<32x64xbf16>
    %c1_46 = arith.constant 1 : index
    %c0_47 = arith.constant 0 : index
    %c0_48 = arith.constant 0 : index
    %163 = vector.load %arg5[%c1_46, %c0_47, %c0_48] : memref<2x64x32xbf16, #tpu.memory_space<vmem>>, vector<1x64x32xbf16>
    %164 = vector.shape_cast %163 : vector<1x64x32xbf16> to vector<64x32xbf16>
    %c1_49 = arith.constant 1 : index
    %c0_50 = arith.constant 0 : index
    %c0_51 = arith.constant 0 : index
    %165 = vector.load %arg6[%c1_49, %c0_50, %c0_51] : memref<2x8x96xf32, #tpu.memory_space<vmem>>, vector<1x8x96xf32>
    %166 = vector.shape_cast %165 : vector<1x8x96xf32> to vector<8x96xf32>
    %167 = vector.extract_strided_slice %166 {offsets = [0, 0], sizes = [1, 96], strides = [1, 1]} : vector<8x96xf32> to vector<1x96xf32>
    %168 = vector.extract_strided_slice %166 {offsets = [1, 0], sizes = [1, 64], strides = [1, 1]} : vector<8x96xf32> to vector<1x64xf32>
    %169 = vector.extract_strided_slice %166 {offsets = [2, 0], sizes = [1, 32], strides = [1, 1]} : vector<8x96xf32> to vector<1x32xf32>
    %170 = vector.extract_strided_slice %166 {offsets = [3, 0], sizes = [1, 32], strides = [1, 1]} : vector<8x96xf32> to vector<1x32xf32>
    %171 = vector.extract_strided_slice %166 {offsets = [4, 0], sizes = [1, 32], strides = [1, 1]} : vector<8x96xf32> to vector<1x32xf32>
    %172 = vector.extract_strided_slice %166 {offsets = [5, 0], sizes = [1, 32], strides = [1, 1]} : vector<8x96xf32> to vector<1x32xf32>
    %173 = vector.extract_strided_slice %166 {offsets = [6, 0], sizes = [1, 32], strides = [1, 1]} : vector<8x96xf32> to vector<1x32xf32>
    %174 = vector.extract_strided_slice %166 {offsets = [7, 0], sizes = [1, 32], strides = [1, 1]} : vector<8x96xf32> to vector<1x32xf32>
    %175 = arith.truncf %156 : vector<8x32xf32> to vector<8x32xbf16>
    %cst_52 = arith.constant dense<0.000000e+00> : vector<8x96xf32>
    %176 = tpu.matmul %175, %158, %cst_52 {dimension_numbers = #tpu.dot_dimension_numbers<[1], [0], [0], [1], [0, 0, 1, 1], [], []>} : vector<8x32xbf16>, vector<32x96xbf16>, vector<8x96xf32> -> vector<8x96xf32>
    %177 = vector.broadcast %167 : vector<1x96xf32> to vector<8x96xf32>
    %178 = arith.addf %176, %177 : vector<8x96xf32>
    %179 = vector.extract_strided_slice %178 {offsets = [0, 0], sizes = [8, 32], strides = [1, 1]} : vector<8x96xf32> to vector<8x32xf32>
    %180 = vector.extract_strided_slice %178 {offsets = [0, 32], sizes = [8, 32], strides = [1, 1]} : vector<8x96xf32> to vector<8x32xf32>
    %181 = vector.extract_strided_slice %178 {offsets = [0, 64], sizes = [8, 32], strides = [1, 1]} : vector<8x96xf32> to vector<8x32xf32>
    %182 = vector.broadcast %8 : vector<1x32xf32> to vector<8x32xf32>
    %183 = arith.mulf %179, %182 : vector<8x32xf32>
    %184 = vector.broadcast %15 : vector<1x32xf32> to vector<8x32xf32>
    %185 = arith.mulf %179, %184 : vector<8x32xf32>
    %186 = vector.broadcast %22 : vector<1x32xf32> to vector<8x32xf32>
    %187 = arith.mulf %179, %186 : vector<8x32xf32>
    %188 = vector.broadcast %29 : vector<1x32xf32> to vector<8x32xf32>
    %189 = arith.mulf %179, %188 : vector<8x32xf32>
    %190 = tpu.concatenate %183, %185, %187, %189 in 0 : vector<8x32xf32>, vector<8x32xf32>, vector<8x32xf32>, vector<8x32xf32> -> vector<32x32xf32>
    %191 = arith.truncf %190 : vector<32x32xf32> to vector<32x32xbf16>
    %192 = arith.truncf %180 : vector<8x32xf32> to vector<8x32xbf16>
    "tpu.trace_start"() <{level = 10 : i32, message = "td,jd->tj"}> : () -> ()
    %cst_53 = arith.constant dense<0.000000e+00> : vector<32x8xf32>
    %193 = tpu.matmul %191, %192, %cst_53 {dimension_numbers = #tpu.dot_dimension_numbers<[1], [1], [0], [0], [0, 0, 1, 0], [], []>} : vector<32x32xbf16>, vector<8x32xbf16>, vector<32x8xf32> -> vector<32x8xf32>
    "tpu.trace_stop"() : () -> ()
    %cst_54 = arith.constant dense<0xFF800000> : vector<32xf32>
    %194 = vector.multi_reduction <maximumf>, %193, %cst_54 [1] : vector<32x8xf32> to vector<32xf32>
    %195 = vector.shape_cast %194 : vector<32xf32> to vector<32x1xf32>
    %196 = vector.broadcast %195 : vector<32x1xf32> to vector<32x8xf32>
    %197 = arith.subf %193, %196 : vector<32x8xf32>
    %198 = math.exp %197 : vector<32x8xf32>
    %cst_55 = arith.constant dense<0.000000e+00> : vector<32xf32>
    %199 = vector.multi_reduction <add>, %198, %cst_55 [1] : vector<32x8xf32> to vector<32xf32>
    %200 = vector.shape_cast %199 : vector<32xf32> to vector<32x1xf32>
    %201 = tpu.reciprocal %200 {approx = true} : vector<32x1xf32> -> vector<32x1xf32>
    %202 = vector.broadcast %201 : vector<32x1xf32> to vector<32x8xf32>
    %203 = arith.mulf %198, %202 : vector<32x8xf32>
    %204 = arith.truncf %203 : vector<32x8xf32> to vector<32x8xbf16>
    %205 = arith.truncf %181 : vector<8x32xf32> to vector<8x32xbf16>
    %cst_56 = arith.constant dense<0.000000e+00> : vector<32x32xf32>
    %206 = tpu.matmul %204, %205, %cst_56 {dimension_numbers = #tpu.dot_dimension_numbers<[1], [0], [0], [1], [0, 0, 1, 1], [], []>} : vector<32x8xbf16>, vector<8x32xbf16>, vector<32x32xf32> -> vector<32x32xf32>
    %cst_57 = arith.constant 0.000000e+00 : f32
    %207 = vector.broadcast %cst_57 : f32 to vector<8x32xf32>
    %208 = vector.extract_strided_slice %206 {offsets = [0, 0], sizes = [8, 32], strides = [1, 1]} : vector<32x32xf32> to vector<8x32xf32>
    %209 = vector.broadcast %8 : vector<1x32xf32> to vector<8x32xf32>
    %210 = arith.mulf %208, %209 : vector<8x32xf32>
    %211 = arith.addf %207, %210 : vector<8x32xf32>
    %212 = vector.extract_strided_slice %206 {offsets = [8, 0], sizes = [8, 32], strides = [1, 1]} : vector<32x32xf32> to vector<8x32xf32>
    %213 = vector.broadcast %15 : vector<1x32xf32> to vector<8x32xf32>
    %214 = arith.mulf %212, %213 : vector<8x32xf32>
    %215 = arith.addf %211, %214 : vector<8x32xf32>
    %216 = vector.extract_strided_slice %206 {offsets = [16, 0], sizes = [8, 32], strides = [1, 1]} : vector<32x32xf32> to vector<8x32xf32>
    %217 = vector.broadcast %22 : vector<1x32xf32> to vector<8x32xf32>
    %218 = arith.mulf %216, %217 : vector<8x32xf32>
    %219 = arith.addf %215, %218 : vector<8x32xf32>
    %220 = vector.extract_strided_slice %206 {offsets = [24, 0], sizes = [8, 32], strides = [1, 1]} : vector<32x32xf32> to vector<8x32xf32>
    %221 = vector.broadcast %29 : vector<1x32xf32> to vector<8x32xf32>
    %222 = arith.mulf %220, %221 : vector<8x32xf32>
    %223 = arith.addf %219, %222 : vector<8x32xf32>
    %224 = arith.truncf %223 : vector<8x32xf32> to vector<8x32xbf16>
    %cst_58 = arith.constant dense<0.000000e+00> : vector<8x32xf32>
    %225 = tpu.matmul %224, %160, %cst_58 {dimension_numbers = #tpu.dot_dimension_numbers<[1], [0], [0], [1], [0, 0, 1, 1], [], []>} : vector<8x32xbf16>, vector<32x32xbf16>, vector<8x32xf32> -> vector<8x32xf32>
    %226 = vector.broadcast %169 : vector<1x32xf32> to vector<8x32xf32>
    %227 = arith.addf %225, %226 : vector<8x32xf32>
    %228 = arith.addf %227, %156 : vector<8x32xf32>
    %cst_59 = arith.constant dense<0.000000e+00> : vector<8xf32>
    %229 = vector.multi_reduction <add>, %228, %cst_59 [1] : vector<8x32xf32> to vector<8xf32>
    %230 = vector.shape_cast %229 : vector<8xf32> to vector<8x1xf32>
    %cst_60 = arith.constant 3.200000e+01 : f32
    %231 = vector.broadcast %cst_60 : f32 to vector<8x1xf32>
    %232 = arith.divf %230, %231 : vector<8x1xf32>
    %233 = vector.broadcast %232 : vector<8x1xf32> to vector<8x32xf32>
    %234 = arith.subf %228, %233 : vector<8x32xf32>
    %235 = arith.mulf %234, %234 : vector<8x32xf32>
    %cst_61 = arith.constant dense<0.000000e+00> : vector<8xf32>
    %236 = vector.multi_reduction <add>, %235, %cst_61 [1] : vector<8x32xf32> to vector<8xf32>
    %237 = vector.shape_cast %236 : vector<8xf32> to vector<8x1xf32>
    %cst_62 = arith.constant 3.200000e+01 : f32
    %238 = vector.broadcast %cst_62 : f32 to vector<8x1xf32>
    %239 = arith.divf %237, %238 : vector<8x1xf32>
    %240 = vector.broadcast %232 : vector<8x1xf32> to vector<8x32xf32>
    %241 = arith.subf %228, %240 : vector<8x32xf32>
    %cst_63 = arith.constant 9.99999974E-6 : f32
    %242 = vector.broadcast %cst_63 : f32 to vector<8x1xf32>
    %243 = arith.addf %239, %242 : vector<8x1xf32>
    %244 = math.rsqrt %243 : vector<8x1xf32>
    %245 = vector.broadcast %244 : vector<8x1xf32> to vector<8x32xf32>
    %246 = arith.mulf %241, %245 : vector<8x32xf32>
    %247 = vector.broadcast %171 : vector<1x32xf32> to vector<8x32xf32>
    %248 = arith.mulf %246, %247 : vector<8x32xf32>
    %249 = vector.broadcast %172 : vector<1x32xf32> to vector<8x32xf32>
    %250 = arith.addf %248, %249 : vector<8x32xf32>
    %251 = arith.truncf %250 : vector<8x32xf32> to vector<8x32xbf16>
    %cst_64 = arith.constant dense<0.000000e+00> : vector<8x64xf32>
    %252 = tpu.matmul %251, %162, %cst_64 {dimension_numbers = #tpu.dot_dimension_numbers<[1], [0], [0], [1], [0, 0, 1, 1], [], []>} : vector<8x32xbf16>, vector<32x64xbf16>, vector<8x64xf32> -> vector<8x64xf32>
    %253 = vector.broadcast %168 : vector<1x64xf32> to vector<8x64xf32>
    %254 = arith.addf %252, %253 : vector<8x64xf32>
    %cst_65 = arith.constant 0.000000e+00 : f32
    %255 = vector.broadcast %cst_65 : f32 to vector<8x64xf32>
    %256 = arith.maximumf %254, %255 : vector<8x64xf32>
    %257 = arith.truncf %256 : vector<8x64xf32> to vector<8x64xbf16>
    %cst_66 = arith.constant dense<0.000000e+00> : vector<8x32xf32>
    %258 = tpu.matmul %257, %164, %cst_66 {dimension_numbers = #tpu.dot_dimension_numbers<[1], [0], [0], [1], [0, 0, 1, 1], [], []>} : vector<8x64xbf16>, vector<64x32xbf16>, vector<8x32xf32> -> vector<8x32xf32>
    %259 = vector.broadcast %170 : vector<1x32xf32> to vector<8x32xf32>
    %260 = arith.addf %258, %259 : vector<8x32xf32>
    %261 = arith.addf %260, %250 : vector<8x32xf32>
    %cst_67 = arith.constant dense<0.000000e+00> : vector<8xf32>
    %262 = vector.multi_reduction <add>, %261, %cst_67 [1] : vector<8x32xf32> to vector<8xf32>
    %263 = vector.shape_cast %262 : vector<8xf32> to vector<8x1xf32>
    %cst_68 = arith.constant 3.200000e+01 : f32
    %264 = vector.broadcast %cst_68 : f32 to vector<8x1xf32>
    %265 = arith.divf %263, %264 : vector<8x1xf32>
    %266 = vector.broadcast %265 : vector<8x1xf32> to vector<8x32xf32>
    %267 = arith.subf %261, %266 : vector<8x32xf32>
    %268 = arith.mulf %267, %267 : vector<8x32xf32>
    %cst_69 = arith.constant dense<0.000000e+00> : vector<8xf32>
    %269 = vector.multi_reduction <add>, %268, %cst_69 [1] : vector<8x32xf32> to vector<8xf32>
    %270 = vector.shape_cast %269 : vector<8xf32> to vector<8x1xf32>
    %cst_70 = arith.constant 3.200000e+01 : f32
    %271 = vector.broadcast %cst_70 : f32 to vector<8x1xf32>
    %272 = arith.divf %270, %271 : vector<8x1xf32>
    %273 = vector.broadcast %265 : vector<8x1xf32> to vector<8x32xf32>
    %274 = arith.subf %261, %273 : vector<8x32xf32>
    %cst_71 = arith.constant 9.99999974E-6 : f32
    %275 = vector.broadcast %cst_71 : f32 to vector<8x1xf32>
    %276 = arith.addf %272, %275 : vector<8x1xf32>
    %277 = math.rsqrt %276 : vector<8x1xf32>
    %278 = vector.broadcast %277 : vector<8x1xf32> to vector<8x32xf32>
    %279 = arith.mulf %274, %278 : vector<8x32xf32>
    %280 = vector.broadcast %173 : vector<1x32xf32> to vector<8x32xf32>
    %281 = arith.mulf %279, %280 : vector<8x32xf32>
    %282 = vector.broadcast %174 : vector<1x32xf32> to vector<8x32xf32>
    %283 = arith.addf %281, %282 : vector<8x32xf32>
    %c0_72 = arith.constant 0 : index
    %c0_73 = arith.constant 0 : index
    %284 = vector.load %arg7[%c0_72, %c0_73] : memref<8x32xf32, #tpu.memory_space<vmem>>, vector<8x32xf32>
    tpu.vector_store %arg7[%c0_72, %c0_73], %283 {strides = array<i32>} : memref<8x32xf32, #tpu.memory_space<vmem>>, vector<8x32xf32>,
    return
  }
  func.func @transform_0(%arg0: i32) -> (i32, i32) {
    %c0_i32 = arith.constant 0 : i32
    %c0_i32_0 = arith.constant 0 : i32
    return %arg0, %c0_i32 : i32, i32
  }
  func.func @transform_1(%arg0: i32) -> (i32, i32, i32) {
    %c0_i32 = arith.constant 0 : i32
    %c0_i32_0 = arith.constant 0 : i32
    %c0_i32_1 = arith.constant 0 : i32
    %c0_i32_2 = arith.constant 0 : i32
    return %c0_i32, %c0_i32_0, %c0_i32_1 : i32, i32, i32
  }
  func.func @transform_2(%arg0: i32) -> (i32, i32, i32) {
    %c0_i32 = arith.constant 0 : i32
    %c0_i32_0 = arith.constant 0 : i32
    %c0_i32_1 = arith.constant 0 : i32
    %c0_i32_2 = arith.constant 0 : i32
    return %c0_i32, %c0_i32_0, %c0_i32_1 : i32, i32, i32
  }
  func.func @transform_3(%arg0: i32) -> (i32, i32, i32) {
    %c0_i32 = arith.constant 0 : i32
    %c0_i32_0 = arith.constant 0 : i32
    %c0_i32_1 = arith.constant 0 : i32
    %c0_i32_2 = arith.constant 0 : i32
    return %c0_i32, %c0_i32_0, %c0_i32_1 : i32, i32, i32
  }
  func.func @transform_4(%arg0: i32) -> (i32, i32, i32) {
    %c0_i32 = arith.constant 0 : i32
    %c0_i32_0 = arith.constant 0 : i32
    %c0_i32_1 = arith.constant 0 : i32
    %c0_i32_2 = arith.constant 0 : i32
    return %c0_i32, %c0_i32_0, %c0_i32_1 : i32, i32, i32
  }
  func.func @transform_5(%arg0: i32) -> (i32, i32, i32) {
    %c0_i32 = arith.constant 0 : i32
    %c0_i32_0 = arith.constant 0 : i32
    %c0_i32_1 = arith.constant 0 : i32
    %c0_i32_2 = arith.constant 0 : i32
    return %c0_i32, %c0_i32_0, %c0_i32_1 : i32, i32, i32
  }
  func.func @transform_6(%arg0: i32) -> (i32, i32) {
    %c0_i32 = arith.constant 0 : i32
    %c0_i32_0 = arith.constant 0 : i32
    return %arg0, %c0_i32 : i32, i32
  }
}

</mosaic_0001>

<llo_original>
// kernel: _lambda_.1
$region0: #{_lambda_.1}
  #allocation0 [shape = 'u32[]', space=smem, size = 0x4, offset = 0x4, fixed_abs, tag = 'smem constant byte address 0x4 - core index']
  #allocation1 [shape = 'u32[144,128]{1,0:T(1,128)}', space=vmem, size = 0x12000, scoped, tag = 'internal scratch']
  %s0 = inlined_call_operand.hbm [shape: f32[16,32], index: 0, kind: input, shape index: {}]
  %s1 = inlined_call_operand.hbm [shape: bf16[2,32,96], index: 1, kind: input, shape index: {}]
  %s2 = inlined_call_operand.hbm [shape: bf16[2,32,32], index: 2, kind: input, shape index: {}]
  %s3 = inlined_call_operand.vmem [shape: bf16[2,32,64], index: 3, kind: input, shape index: {}]
  %s4 = inlined_call_operand.hbm [shape: bf16[2,64,32], index: 4, kind: input, shape index: {}]
  %s5 = inlined_call_operand.hbm [shape: f32[2,8,96], index: 5, kind: input, shape index: {}]
  %s6 = inlined_call_operand.hbm [shape: f32[16,32], index: 6, kind: output, shape index: {}]
  %s7 = sld [smem:[#allocation0]]
  $region77: #{_lambda_.1} parent=0
    _
  %s9 = ssub.s32 1, %s7
  %s10 = scalar_select 0, %s9, %s7
  $region1: #{_lambda_.1} parent=0
    #allocation2 [shape = 'u8[8192]{0}', space=vmem, size = 0x2000, scoped, tag = 'input window, operand 0']
    #allocation3 [shape = 's32[2]{0}', space=sflag, size = 0x8, scoped, tag = 'scoped memory for _lambda_.1']
    #allocation4 [shape = 's32[2]{0}', space=sflag, size = 0x8, scoped, tag = 'scoped memory for _lambda_.1']
    #allocation5 [shape = 'u8[16384]{0}', space=vmem, size = 0x4000, scoped, tag = 'input window, operand 1, single buffered']
    #allocation6 [shape = 's32[1]{0}', space=sflag, size = 0x4, scoped, tag = 'scoped memory for _lambda_.1']
    #allocation7 [shape = 'u8[16384]{0}', space=vmem, size = 0x4000, scoped, tag = 'input window, operand 2, single buffered']
    #allocation8 [shape = 'u8[32768]{0}', space=vmem, size = 0x8000, scoped, tag = 'input window, operand 4, single buffered']
    #allocation9 [shape = 's32[1]{0}', space=sflag, size = 0x4, scoped, tag = 'scoped memory for _lambda_.1']
    #allocation10 [shape = 'u8[8192]{0}', space=vmem, size = 0x2000, scoped, tag = 'input window, operand 5, single buffered']
    #allocation11 [shape = 'u8[8192]{0}', space=vmem, size = 0x2000, scoped, tag = 'output window, operand 0']
    %11 = vsyncpa [#allocation3], 0
    %s12 = scalar_lea.sflag [#allocation3], 1
    %13 = vsyncpa %s12, 0
    %14 = vsyncpa [#allocation6], 0
    %15 = vsyncpa [#allocation9], 0
    %16 = vsyncpa [#allocation4], 0
    %s17 = scalar_lea.sflag [#allocation4], 1
    %18 = vsyncpa %s17, 0
    loop: start=0, step=1, limit=4
    $region2: #{_lambda_.1} parent=1 // loop_pre_header
      _
    $region3: #{_lambda_.1} parent=1 // loop_header
      %s20 = sphi 0, %s24
      %p21 = scmp.ge.s32.totalorder %s20, 4
      %s30 = sphi 0, %s32
      %s33 = sphi 0, %s30
      %s34 = sphi 0, %s33
      %s50 = sphi 0, %s34
      %s54 = sphi 0, %s54
      %s56 = sphi 0, %s54
      %s57 = sphi 0, %s56
      %s71 = sphi 0, %s57
      %s75 = sphi 0, %s75
      %s77 = sphi 0, %s75
      %s78 = sphi 0, %s77
      %s92 = sphi 0, %s78
      %s96 = sphi 0, %s96
      %s98 = sphi 0, %s96
      %s99 = sphi 0, %s98
      %s113 = sphi 0, %s99
      %s117 = sphi 0, %s117
      %s119 = sphi 0, %s117
      %s120 = sphi 0, %s119
      %s134 = sphi 0, %s120
      %s138 = sphi 0, %s138
      %s140 = sphi 0, %s138
      %s141 = sphi 0, %s140
      %s155 = sphi 0, %s141
      %s161 = sphi 0, %s163
      %s164 = sphi 0, %s161
      %s165 = sphi 0, %s164
      %s181 = sphi 0, %s165
    $region4: #{_lambda_.1} parent=1 // loop_header_branch
      %23 = sbr.rel (%p21) target = $region8
    $region5: #{_lambda_.1} parent=1 // loop_body
      %s25 = ssub.s32 %s20, 1
      %s26 = ssub.s32 %s20, 2
      %s27 = sadd.s32 %s20, 1
      %s28 = ssub.s32 %s20, %s27
      %p29 = scmp.eq.s32.totalorder %s28, 0
      %s31 = sadd.s32 %s30, 1
      %s32 = scalar_select %p29, %s30, %s31
      %p35 = pneg %p29
      %p36 = scmp.eq.s32.totalorder %s20, 1
      %p37 = por %p35, %p36
      %p38 = scmp.ne.s32.totalorder %s30, %s33
      %p39 = scmp.eq.s32.totalorder %s20, 0
      %p40 = por %p38, %p39
      %p41 = scmp.ne.s32.totalorder %s30, %s33
      %p42 = scmp.eq.s32.totalorder %s25, 1
      %p43 = por %p41, %p42
      %p44 = scmp.ne.s32.totalorder %s33, %s34
      %p45 = scmp.eq.s32.totalorder %s25, 0
      %p46 = por %p44, %p45
      %p47 = scmp.ne.s32.totalorder %s33, %s34
      %p48 = scmp.eq.s32.totalorder %s26, 1
      %p49 = por %p47, %p48
      %p51 = scmp.ne.s32.totalorder %s34, %s50
      %p52 = scmp.eq.s32.totalorder %s26, 0
      %p53 = por %p51, %p52
      %s55 = sadd.s32 %s54, 1
      %p58 = scmp.eq.s32.totalorder %s20, 1
      %p59 = scmp.ne.s32.totalorder %s54, %s56
      %p60 = scmp.eq.s32.totalorder %s20, 0
      %p61 = por %p59, %p60
      %p62 = scmp.ne.s32.totalorder %s54, %s56
      %p63 = scmp.eq.s32.totalorder %s25, 1
      %p64 = por %p62, %p63
      %p65 = scmp.ne.s32.totalorder %s56, %s57
      %p66 = scmp.eq.s32.totalorder %s25, 0
      %p67 = por %p65, %p66
      %p68 = scmp.ne.s32.totalorder %s56, %s57
      %p69 = scmp.eq.s32.totalorder %s26, 1
      %p70 = por %p68, %p69
      %p72 = scmp.ne.s32.totalorder %s57, %s71
      %p73 = scmp.eq.s32.totalorder %s26, 0
      %p74 = por %p72, %p73
      %s76 = sadd.s32 %s75, 1
      %p79 = scmp.eq.s32.totalorder %s20, 1
      %p80 = scmp.ne.s32.totalorder %s75, %s77
      %p81 = scmp.eq.s32.totalorder %s20, 0
      %p82 = por %p80, %p81
      %p83 = scmp.ne.s32.totalorder %s75, %s77
      %p84 = scmp.eq.s32.totalorder %s25, 1
      %p85 = por %p83, %p84
      %p86 = scmp.ne.s32.totalorder %s77, %s78
      %p87 = scmp.eq.s32.totalorder %s25, 0
      %p88 = por %p86, %p87
      %p89 = scmp.ne.s32.totalorder %s77, %s78
      %p90 = scmp.eq.s32.totalorder %s26, 1
      %p91 = por %p89, %p90
      %p93 = scmp.ne.s32.totalorder %s78, %s92
      %p94 = scmp.eq.s32.totalorder %s26, 0
      %p95 = por %p93, %p94
      %s97 = sadd.s32 %s96, 1
      %p100 = scmp.eq.s32.totalorder %s20, 1
      %p101 = scmp.ne.s32.totalorder %s96, %s98
      %p102 = scmp.eq.s32.totalorder %s20, 0
      %p103 = por %p101, %p102
      %p104 = scmp.ne.s32.totalorder %s96, %s98
      %p105 = scmp.eq.s32.totalorder %s25, 1
      %p106 = por %p104, %p105
      %p107 = scmp.ne.s32.totalorder %s98, %s99
      %p108 = scmp.eq.s32.totalorder %s25, 0
      %p109 = por %p107, %p108
      %p110 = scmp.ne.s32.totalorder %s98, %s99
      %p111 = scmp.eq.s32.totalorder %s26, 1
      %p112 = por %p110, %p111
      %p114 = scmp.ne.s32.totalorder %s99, %s113
      %p115 = scmp.eq.s32.totalorder %s26, 0
      %p116 = por %p114, %p115
      %s118 = sadd.s32 %s117, 1
      %p121 = scmp.eq.s32.totalorder %s20, 1
      %p122 = scmp.ne.s32.totalorder %s117, %s119
      %p123 = scmp.eq.s32.totalorder %s20, 0
      %p124 = por %p122, %p123
      %p125 = scmp.ne.s32.totalorder %s117, %s119
      %p126 = scmp.eq.s32.totalorder %s25, 1
      %p127 = por %p125, %p126
      %p128 = scmp.ne.s32.totalorder %s119, %s120
      %p129 = scmp.eq.s32.totalorder %s25, 0
      %p130 = por %p128, %p129
      %p131 = scmp.ne.s32.totalorder %s119, %s120
      %p132 = scmp.eq.s32.totalorder %s26, 1
      %p133 = por %p131, %p132
      %p135 = scmp.ne.s32.totalorder %s120, %s134
      %p136 = scmp.eq.s32.totalorder %s26, 0
      %p137 = por %p135, %p136
      %s139 = sadd.s32 %s138, 1
      %p142 = scmp.eq.s32.totalorder %s20, 1
      %p143 = scmp.ne.s32.totalorder %s138, %s140
      %p144 = scmp.eq.s32.totalorder %s20, 0
      %p145 = por %p143, %p144
      %p146 = scmp.ne.s32.totalorder %s138, %s140
      %p147 = scmp.eq.s32.totalorder %s25, 1
      %p148 = por %p146, %p147
      %p149 = scmp.ne.s32.totalorder %s140, %s141
      %p150 = scmp.eq.s32.totalorder %s25, 0
      %p151 = por %p149, %p150
      %p152 = scmp.ne.s32.totalorder %s140, %s141
      %p153 = scmp.eq.s32.totalorder %s26, 1
      %p154 = por %p152, %p153
      %p156 = scmp.ne.s32.totalorder %s141, %s155
      %p157 = scmp.eq.s32.totalorder %s26, 0
      %p158 = por %p156, %p157
      %s159 = ssub.s32 %s20, %s27
      %p160 = scmp.eq.s32.totalorder %s159, 0
      %s162 = sadd.s32 %s161, 1
      %s163 = scalar_select %p160, %s161, %s162
      %p166 = pneg %p160
      %p167 = scmp.eq.s32.totalorder %s20, 1
      %p168 = por %p166, %p167
      %p169 = scmp.ne.s32.totalorder %s161, %s164
      %p170 = scmp.eq.s32.totalorder %s20, 0
      %p171 = por %p169, %p170
      %p172 = scmp.ne.s32.totalorder %s161, %s164
      %p173 = scmp.eq.s32.totalorder %s25, 1
      %p174 = por %p172, %p173
      %p175 = scmp.ne.s32.totalorder %s164, %s165
      %p176 = scmp.eq.s32.totalorder %s25, 0
      %p177 = por %p175, %p176
      %p178 = scmp.ne.s32.totalorder %s164, %s165
      %p179 = scmp.eq.s32.totalorder %s26, 1
      %p180 = por %p178, %p179
      %p182 = scmp.ne.s32.totalorder %s165, %s181
      %p183 = scmp.eq.s32.totalorder %s26, 0
      %p184 = por %p182, %p183
      %p185 = scmp.le.s32.totalorder 1, %s20
      %p186 = scmp.lt.s32.totalorder %s20, 3
      %p187 = pnand %p185, %p186
      %p188 = pneg %p187
      // Predicated region
      $region9: #{_lambda_.1} parent=5 // pred_check
        _
      $region10: #{_lambda_.1} parent=5 // pred_check_branch
        %190 = sbr.rel (%p187) target = $region12
      $region11: #{_lambda_.1} parent=5 // pred_region
        %s191 = ssub.s32 %s20, 1
        // Predicated region
        $region13: #{_lambda_.1} parent=11 // pred_check
          %p192 = pneg %p67
        $region14: #{_lambda_.1} parent=11 // pred_check_branch
          %194 = sbr.rel (%p192) target = $region16
        $region15: #{_lambda_.1} parent=11 // pred_region
          %s196 = ssub.s32 512, 512
          %197 = vsyncadd [#allocation6], %s196
          %s198 = sshll.u32 [#allocation5], 4
          %s199 = int_to_ptr.vmem [resolvable:$true] %s198
          %204 = dma.hbm_to_vmem [thread:$0]  %s1, 512, %s199, [#allocation6], 64, 64, 4
        $region16: #{_lambda_.1} parent=11 // pred_fallthru
          _
        // Predicated region
        $region17: #{_lambda_.1} parent=11 // pred_check
          %p205 = pneg %p88
        $region18: #{_lambda_.1} parent=11 // pred_check_branch
          %207 = sbr.rel (%p205) target = $region20
        $region19: #{_lambda_.1} parent=11 // pred_region
          %s209 = ssub.s32 512, 512
          %210 = vsyncadd [#allocation6], %s209
          %s211 = sshll.u32 [#allocation7], 4
          %s212 = int_to_ptr.vmem [resolvable:$true] %s211
          %217 = dma.hbm_to_vmem [thread:$0]  %s2, 512, %s212, [#allocation6], 64, 64, 4
        $region20: #{_lambda_.1} parent=11 // pred_fallthru
          _
        // Predicated region
        $region21: #{_lambda_.1} parent=11 // pred_check
          %p218 = pneg %p109
        $region22: #{_lambda_.1} parent=11 // pred_check_branch
          %220 = sbr.rel (%p218) target = $region24
        $region23: #{_lambda_.1} parent=11 // pred_region
          _
        $region24: #{_lambda_.1} parent=11 // pred_fallthru
          _
        // Predicated region
        $region25: #{_lambda_.1} parent=11 // pred_check
          %p221 = pneg %p130
        $region26: #{_lambda_.1} parent=11 // pred_check_branch
          %223 = sbr.rel (%p221) target = $region28
        $region27: #{_lambda_.1} parent=11 // pred_region
          %s225 = ssub.s32 1024, 1024
          %226 = vsyncadd [#allocation9], %s225
          %s227 = sshll.u32 [#allocation8], 4
          %s228 = int_to_ptr.vmem [resolvable:$true] %s227
          %233 = dma.hbm_to_vmem [thread:$0]  %s4, 1024, %s228, [#allocation9], 64, 64, 4
        $region28: #{_lambda_.1} parent=11 // pred_fallthru
          _
        // Predicated region
        $region29: #{_lambda_.1} parent=11 // pred_check
          %p234 = pneg %p151
        $region30: #{_lambda_.1} parent=11 // pred_check_branch
          %236 = sbr.rel (%p234) target = $region32
        $region31: #{_lambda_.1} parent=11 // pred_region
          %s238 = ssub.s32 256, 256
          %239 = vsyncadd [#allocation9], %s238
          %s240 = sshll.u32 [#allocation10], 4
          %s241 = int_to_ptr.vmem [resolvable:$true] %s240
          %246 = dma.hbm_to_vmem [thread:$0]  %s5, 256, %s241, [#allocation9], 128, 128, 8
        $region32: #{_lambda_.1} parent=11 // pred_fallthru
          _
      $region12: #{_lambda_.1} parent=5 // pred_fallthru
        _
      %p247 = scmp.lt.s32.totalorder %s20, 2
      // Predicated region
      $region33: #{_lambda_.1} parent=5 // pred_check
        %p248 = pneg %p247
      $region34: #{_lambda_.1} parent=5 // pred_check_branch
        %250 = sbr.rel (%p248) target = $region36
      $region35: #{_lambda_.1} parent=5 // pred_region
        // Predicated region
        $region37: #{_lambda_.1} parent=35 // pred_check
          %p251 = pneg %p40
        $region38: #{_lambda_.1} parent=35 // pred_check_branch
          %253 = sbr.rel (%p251) target = $region40
        $region39: #{_lambda_.1} parent=35 // pred_region
          %s254 = sand.u32 %s30, 1
          %s255 = scalar_lea.sflag [#allocation3], %s254
          %s256 = sand.u32 %s30, 1
          %s257 = smul.addr %s256, 8
          %s258 = scalar_lea.vmem [#allocation2], %s257
          %s260 = ssub.s32 128, 128
          %261 = vsyncadd %s255, %s260
          %s262 = smul.addr %s20, 128
          %s263 = scalar_lea.hbm %s0, %s262
          %s265 = sshll.u32 %s258, 4
          %s266 = int_to_ptr.vmem [resolvable:$true] %s265
          %268 = dma.hbm_to_vmem [thread:$0]  %s263, 128, %s266, %s255
        $region40: #{_lambda_.1} parent=35 // pred_fallthru
          _
      $region36: #{_lambda_.1} parent=5 // pred_fallthru
        _
      %p269 = scmp.le.s32.totalorder 1, %s20
      %p270 = scmp.lt.s32.totalorder %s20, 3
      %p271 = pnand %p269, %p270
      %p272 = pneg %p271
      // Predicated region
      $region41: #{_lambda_.1} parent=5 // pred_check
        _
      $region42: #{_lambda_.1} parent=5 // pred_check_branch
        %274 = sbr.rel (%p271) target = $region44
      $region43: #{_lambda_.1} parent=5 // pred_region
        %s275 = ssub.s32 %s20, 1
        %s276 = sand.u32 %s33, 1
        %s277 = scalar_lea.sflag [#allocation3], %s276
        %s278 = sand.u32 %s33, 1
        %s279 = smul.addr %s278, 8
        %s280 = scalar_lea.vmem [#allocation2], %s279
        // Predicated region
        $region45: #{_lambda_.1} parent=43 // pred_check
          %p281 = pneg %p46
        $region46: #{_lambda_.1} parent=43 // pred_check_branch
          %283 = sbr.rel (%p281) target = $region48
        $region47: #{_lambda_.1} parent=43 // pred_region
          %284 = dma.done %s277, 128
        $region48: #{_lambda_.1} parent=43 // pred_fallthru
          _
        // Predicated region
        $region49: #{_lambda_.1} parent=43 // pred_check
          %p285 = pneg %p67
        $region50: #{_lambda_.1} parent=43 // pred_check_branch
          %287 = sbr.rel (%p285) target = $region52
        $region51: #{_lambda_.1} parent=43 // pred_region
          %288 = dma.done [#allocation6], 512
        $region52: #{_lambda_.1} parent=43 // pred_fallthru
          _
        // Predicated region
        $region53: #{_lambda_.1} parent=43 // pred_check
          %p289 = pneg %p88
        $region54: #{_lambda_.1} parent=43 // pred_check_branch
          %291 = sbr.rel (%p289) target = $region56
        $region55: #{_lambda_.1} parent=43 // pred_region
          %292 = dma.done [#allocation6], 512
        $region56: #{_lambda_.1} parent=43 // pred_fallthru
          _
        // Predicated region
        $region57: #{_lambda_.1} parent=43 // pred_check
          %p293 = pneg %p130
        $region58: #{_lambda_.1} parent=43 // pred_check_branch
          %295 = sbr.rel (%p293) target = $region60
        $region59: #{_lambda_.1} parent=43 // pred_region
          %296 = dma.done [#allocation9], 1024
        $region60: #{_lambda_.1} parent=43 // pred_fallthru
          _
        // Predicated region
        $region61: #{_lambda_.1} parent=43 // pred_check
          %p297 = pneg %p151
        $region62: #{_lambda_.1} parent=43 // pred_check_branch
          %299 = sbr.rel (%p297) target = $region64
        $region63: #{_lambda_.1} parent=43 // pred_region
          %300 = dma.done [#allocation9], 256
        $region64: #{_lambda_.1} parent=43 // pred_fallthru
          _
        %s301 = sand.u32 %s33, 1
        %s302 = scalar_lea.sflag [#allocation3], %s301
        %s303 = sand.u32 %s33, 1
        %s304 = smul.addr %s303, 8
        %s305 = scalar_lea.vmem [#allocation2], %s304
        %p306 = pneg %p46
        %p307 = pneg %p43
        %p308 = pneg %p67
        %p309 = pneg %p64
        %p310 = pneg %p88
        %p311 = pneg %p85
        %p312 = pneg %p109
        %p313 = pneg %p106
        %p314 = pneg %p130
        %p315 = pneg %p127
        %p316 = pneg %p151
        %p317 = pneg %p148
        %p318 = pneg %p177
        %p319 = pneg %p174
        %s320 = sand.u32 %s164, 1
        %s321 = scalar_lea.sflag [#allocation4], %s320
        %s322 = sand.u32 %s164, 1
        %s323 = smul.addr %s322, 8
        %s324 = scalar_lea.vmem [#allocation11], %s323
        %v326 = vld [vmem:[%s280] sm:$0xff]
        %v327 = vlaneseq
        %v328 = vand.u32 %v327, 127
        %vm329 = vcmp.ge.s32.totalorder %v328, 0
        %vm330 = vcmp.lt.s32.totalorder %v328, 8
        %vm331 = vmand %vm329, %vm330
        %v332 = vsel %vm331, 1, 0
        %v333 = vcvt.s32.f32 %v332
        %vm334 = vcmp.ge.s32.totalorder %v328, 8
        %vm335 = vcmp.lt.s32.totalorder %v328, 16
        %vm336 = vmand %vm334, %vm335
        %v337 = vsel %vm336, 1, 0
        %v338 = vcvt.s32.f32 %v337
        %vm339 = vcmp.ge.s32.totalorder %v328, 16
        %vm340 = vcmp.lt.s32.totalorder %v328, 24
        %vm341 = vmand %vm339, %vm340
        %v342 = vsel %vm341, 1, 0
        %v343 = vcvt.s32.f32 %v342
        %vm344 = vcmp.ge.s32.totalorder %v328, 24
        %vm345 = vcmp.lt.s32.totalorder %v328, 32
        %vm346 = vmand %vm344, %vm345
        %v347 = vsel %vm346, 1, 0
        %v348 = vcvt.s32.f32 %v347
        %v349 = vld [vmem:[#allocation5] sm:$0xf]
        %v350 = vld [vmem:[#allocation5 + $0x4] sm:$0xf]
        %v351 = vld [vmem:[#allocation5 + $0x8] sm:$0xf]
        %v352 = vld [vmem:[#allocation5 + $0xc] sm:$0xf]
        %v353 = vld [vmem:[#allocation7] sm:$0xf]
        %v354 = vld [vmem:[#allocation7 + $0x4] sm:$0xf]
        %v355 = vld [vmem:[#allocation7 + $0x8] sm:$0xf]
        %v356 = vld [vmem:[#allocation7 + $0xc] sm:$0xf]
        %v357 = vld [vmem:[%s3] sm:$0xf]
        %v358 = vld [vmem:[%s3 + $0x4] sm:$0xf]
        %v359 = vld [vmem:[%s3 + $0x8] sm:$0xf]
        %v360 = vld [vmem:[%s3 + $0xc] sm:$0xf]
        %v361 = vld [vmem:[#allocation8] sm:$0xf]
        %v362 = vld [vmem:[#allocation8 + $0x4] sm:$0xf]
        %v363 = vld [vmem:[#allocation8 + $0x8] sm:$0xf]
        %v364 = vld [vmem:[#allocation8 + $0xc] sm:$0xf]
        %v365 = vld [vmem:[#allocation8 + $0x10] sm:$0xf]
        %v366 = vld [vmem:[#allocation8 + $0x14] sm:$0xf]
        %v367 = vld [vmem:[#allocation8 + $0x18] sm:$0xf]
        %v368 = vld [vmem:[#allocation8 + $0x1c] sm:$0xf]
        %v369 = vld [vmem:[#allocation10] sm:$0xff]
        %v370 = vpack.c.bf16 %v326, %v326
        %v371 = vlaneseq
        %v372 = vshrl.u32 %v371, 7
        %v373 = vsub.s32 0, %v372
        %v374 = vrot.slane %v369, %v373
        %v379 = vunpack.c.l.b16 %v349
        %v380 = vunpack.c.l.b16 %v350
        %v381 = vunpack.c.l.b16 %v351
        %v382 = vunpack.c.l.b16 %v352
        %v383 = vpack.c.b16 %v380, %v379
        %v384 = vpack.c.b16 %v382, %v381
        %vm387 = vcmask 261120
        %v389 = vsel %vm387, %v370, 0
        %391 = vmatprep.subr.bf16.mxu0 0
        %392 = vmatpush1.bf16.msra.mxu0 %v383
        %393 = vmatprep.subr.bf16.mxu0 0
        %394 = vmatpush1.bf16.msra.mxu0 %v384
        %395 = vmatprep.subr.bf16.mxu0 0
        %396 = vmatpush1.bf16.msra.mxu0 0
        %397 = vmatprep.subr.bf16.mxu0 0
        %398 = vmatpush1.bf16.msra.mxu0 0
        %399 = vmatprep.subr.bf16.mxu0 0
        %400 = vmatpush1.bf16.msra.mxu0 0
        %401 = vmatprep.subr.bf16.mxu0 0
        %402 = vmatpush1.bf16.msra.mxu0 0
        %403 = vmatprep.subr.bf16.mxu0 0
        %404 = vmatpush1.bf16.msra.mxu0 0
        %405 = vmatprep.subr.bf16.mxu0 0
        %406 = vmatpush1.bf16.msra.mxu0 0
        %407 = vmatprep.subr.bf16.mxu0 0
        %408 = vmatpush1.bf16.msra.mxu0 0
        %409 = vmatprep.subr.bf16.mxu0 0
        %410 = vmatpush1.bf16.msra.mxu0 0
        %411 = vmatprep.subr.bf16.mxu0 0
        %412 = vmatpush1.bf16.msra.mxu0 0
        %413 = vmatprep.subr.bf16.mxu0 0
        %414 = vmatpush1.bf16.msra.mxu0 0
        %415 = vmatprep.subr.bf16.mxu0 0
        %416 = vmatpush1.bf16.msra.mxu0 0
        %417 = vmatprep.subr.bf16.mxu0 0
        %418 = vmatpush1.bf16.msra.mxu0 0
        %419 = vmatprep.subr.bf16.mxu0 0
        %420 = vmatpush1.bf16.msra.mxu0 0
        %421 = vmatprep.subr.bf16.mxu0 0
        %422 = vmatpush1.bf16.msra.mxu0 0
        %423 = vmatprep.mubr.bf16.mxu0 0
        %424 = vmatmul.mubr.bf16.gmra.mrb[0].mxu0 %v389
        %v425 = vpop.f32.mrb[0].mxu0
        %v426 = vadd.f32 %v374, %v425
        %v427 = vpop.f32.mrb[0].mxu0
        %v428 = vpop.f32.mrb[0].mxu0
        %v429 = vpop.f32.mrb[0].mxu0
        %430 = vdwg.mxu0
        %v431 = vmul.f32 %v426, %v333
        %v432 = vmul.f32 %v426, %v338
        %v433 = vmul.f32 %v426, %v343
        %v434 = vmul.f32 %v426, %v348
        %v435 = vpack.c.bf16 %v432, %v431
        %v436 = vpack.c.bf16 %v434, %v433
        %v437 = vpack.c.bf16 %v426, %v426
        %439 = vrot.lane.b32.xlu0 %v437, 96
        %v440 = vpop.permute.xlu0 %439
        %v442 = vsel %vm387, %v435, 0
        %v445 = vsel %vm387, %v436, 0
        %v448 = vsel %vm387, %v440, 0
        %450 = vmatprep.subr.bf16.mxu0 0
        %451 = vmatpush1.bf16.xpose.msra.mxu0 %v448
        %452 = vmatprep.subr.bf16.mxu0 0
        %453 = vmatpush1.bf16.xpose.msra.mxu0 0
        %454 = vmatprep.subr.bf16.mxu0 0
        %455 = vmatpush1.bf16.xpose.msra.mxu0 0
        %456 = vmatprep.subr.bf16.mxu0 0
        %457 = vmatpush1.bf16.xpose.msra.mxu0 0
        %458 = vmatprep.subr.bf16.mxu0 0
        %459 = vmatpush1.bf16.xpose.msra.mxu0 0
        %460 = vmatprep.subr.bf16.mxu0 0
        %461 = vmatpush1.bf16.xpose.msra.mxu0 0
        %462 = vmatprep.subr.bf16.mxu0 0
        %463 = vmatpush1.bf16.xpose.msra.mxu0 0
        %464 = vmatprep.subr.bf16.mxu0 0
        %465 = vmatpush1.bf16.xpose.msra.mxu0 0
        %466 = vmatprep.subr.bf16.mxu0 0
        %467 = vmatpush1.bf16.xpose.msra.mxu0 0
        %468 = vmatprep.subr.bf16.mxu0 0
        %469 = vmatpush1.bf16.xpose.msra.mxu0 0
        %470 = vmatprep.subr.bf16.mxu0 0
        %471 = vmatpush1.bf16.xpose.msra.mxu0 0
        %472 = vmatprep.subr.bf16.mxu0 0
        %473 = vmatpush1.bf16.xpose.msra.mxu0 0
        %474 = vmatprep.subr.bf16.mxu0 0
        %475 = vmatpush1.bf16.xpose.msra.mxu0 0
        %476 = vmatprep.subr.bf16.mxu0 0
        %477 = vmatpush1.bf16.xpose.msra.mxu0 0
        %478 = vmatprep.subr.bf16.mxu0 0
        %479 = vmatpush1.bf16.xpose.msra.mxu0 0
        %480 = vmatprep.subr.bf16.mxu0 0
        %481 = vmatpush1.bf16.xpose.msra.mxu0 0
        %482 = vmatprep.mubr.bf16.mxu0 0
        %483 = vmatmul.mubr.bf16.gmra.mrb[0].mxu0 %v442
        %v484 = vpop.f32.mrb[0].mxu0
        %v485 = vadd.f32 0.0, %v484
        %v486 = vpop.f32.mrb[0].mxu0
        %v487 = vpop.f32.mrb[0].mxu0
        %v488 = vadd.f32 0.0, %v487
        %v489 = vpop.f32.mrb[0].mxu0
        %490 = vmatprep.mubr.bf16.mxu0 0
        %491 = vmatmul.mubr.bf16.gmra.mrb[0].mxu0 %v445
        %v492 = vpop.f32.mrb[0].mxu0
        %v493 = vadd.f32 0.0, %v492
        %v494 = vpop.f32.mrb[0].mxu0
        %v495 = vpop.f32.mrb[0].mxu0
        %v496 = vadd.f32 0.0, %v495
        %v497 = vpop.f32.mrb[0].mxu0
        %498 = vdwg.mxu0
        %vm499 = vcmask 64512
        %v500 = vsel %vm499, %v485, -inf
        %501 = vmax.xlane.f32.xlu0 %v500
        %v502 = vpop.xlane.xlu0 %501
        %v503 = vsel %vm499, %v488, -inf
        %504 = vmax.xlane.f32.xlu0 %v503
        %v505 = vpop.xlane.xlu0 %504
        %v506 = vsel %vm499, %v493, -inf
        %507 = vmax.xlane.f32.xlu0 %v506
        %v508 = vpop.xlane.xlu0 %507
        %v509 = vsel %vm499, %v496, -inf
        %510 = vmax.xlane.f32.xlu0 %v509
        %v511 = vpop.xlane.xlu0 %510
        %v512 = vsub.f32 %v485, %v502
        %v513 = vsub.f32 %v488, %v505
        %v514 = vsub.f32 %v493, %v508
        %v515 = vsub.f32 %v496, %v511
        %v516 = vmul.f32 %v512, 1.442695
        %v517 = vpow.pop %v516
        %v518 = vmul.f32 %v513, 1.442695
        %v519 = vpow.pop %v518
        %v520 = vmul.f32 %v514, 1.442695
        %v521 = vpow.pop %v520
        %v522 = vmul.f32 %v515, 1.442695
        %v523 = vpow.pop %v522
        %v524 = vsel %vm499, %v517, 0.0
        %525 = vadd.xlane.f32.xlu0 %v524
        %v526 = vpop.xlane.xlu0 %525
        %v527 = vsel %vm499, %v519, 0.0
        %528 = vadd.xlane.f32.xlu0 %v527
        %v529 = vpop.xlane.xlu0 %528
        %v530 = vsel %vm499, %v521, 0.0
        %531 = vadd.xlane.f32.xlu0 %v530
        %v532 = vpop.xlane.xlu0 %531
        %v533 = vsel %vm499, %v523, 0.0
        %534 = vadd.xlane.f32.xlu0 %v533
        %v535 = vpop.xlane.xlu0 %534
        %v536 = vrcp.pop %v526
        %v537 = vrcp.pop %v529
        %v538 = vrcp.pop %v532
        %v539 = vrcp.pop %v535
        %v540 = vmul.f32 %v517, %v536
        %v541 = vmul.f32 %v519, %v537
        %v542 = vmul.f32 %v521, %v538
        %v543 = vmul.f32 %v523, %v539
        %v544 = vpack.c.bf16 %v541, %v540
        %v545 = vpack.c.bf16 %v543, %v542
        %546 = vrot.lane.b32.xlu0 %v437, 64
        %v547 = vpop.permute.xlu0 %546
        %v549 = vsel %vm499, %v544, 0
        %v552 = vsel %vm499, %v545, 0
        %vm554 = vcmask 1043456
        %v556 = vsel %vm554, %v547, 0
        %558 = vmatprep.subr.bf16.mxu0 0
        %559 = vmatpush1.bf16.msra.mxu0 %v556
        %560 = vmatprep.subr.bf16.mxu0 0
        %561 = vmatpush1.bf16.msra.mxu0 0
        %562 = vmatprep.subr.bf16.mxu0 0
        %563 = vmatpush1.bf16.msra.mxu0 0
        %564 = vmatprep.subr.bf16.mxu0 0
        %565 = vmatpush1.bf16.msra.mxu0 0
        %566 = vmatprep.subr.bf16.mxu0 0
        %567 = vmatpush1.bf16.msra.mxu0 0
        %568 = vmatprep.subr.bf16.mxu0 0
        %569 = vmatpush1.bf16.msra.mxu0 0
        %570 = vmatprep.subr.bf16.mxu0 0
        %571 = vmatpush1.bf16.msra.mxu0 0
        %572 = vmatprep.subr.bf16.mxu0 0
        %573 = vmatpush1.bf16.msra.mxu0 0
        %574 = vmatprep.subr.bf16.mxu0 0
        %575 = vmatpush1.bf16.msra.mxu0 0
        %576 = vmatprep.subr.bf16.mxu0 0
        %577 = vmatpush1.bf16.msra.mxu0 0
        %578 = vmatprep.subr.bf16.mxu0 0
        %579 = vmatpush1.bf16.msra.mxu0 0
        %580 = vmatprep.subr.bf16.mxu0 0
        %581 = vmatpush1.bf16.msra.mxu0 0
        %582 = vmatprep.subr.bf16.mxu0 0
        %583 = vmatpush1.bf16.msra.mxu0 0
        %584 = vmatprep.subr.bf16.mxu0 0
        %585 = vmatpush1.bf16.msra.mxu0 0
        %586 = vmatprep.subr.bf16.mxu0 0
        %587 = vmatpush1.bf16.msra.mxu0 0
        %588 = vmatprep.subr.bf16.mxu0 0
        %589 = vmatpush1.bf16.msra.mxu0 0
        %590 = vmatprep.mubr.bf16.mxu0 0
        %591 = vmatmul.mubr.bf16.gmra.mrb[0].mxu0 %v549
        %v592 = vpop.f32.mrb[0].mxu0
        %v593 = vadd.f32 0.0, %v592
        %v594 = vpop.f32.mrb[0].mxu0
        %v595 = vpop.f32.mrb[0].mxu0
        %v596 = vadd.f32 0.0, %v595
        %v597 = vpop.f32.mrb[0].mxu0
        %598 = vmatprep.mubr.bf16.mxu0 0
        %599 = vmatmul.mubr.bf16.gmra.mrb[0].mxu0 %v552
        %v600 = vpop.f32.mrb[0].mxu0
        %v601 = vadd.f32 0.0, %v600
        %v602 = vpop.f32.mrb[0].mxu0
        %v603 = vpop.f32.mrb[0].mxu0
        %v604 = vadd.f32 0.0, %v603
        %v605 = vpop.f32.mrb[0].mxu0
        %606 = vdwg.mxu0
        %v607 = vmul.f32 %v593, %v333
        %v608 = vadd.f32 %v607, 0.0
        %v609 = vmul.f32 %v596, %v338
        %v610 = vadd.f32 %v608, %v609
        %v611 = vmul.f32 %v601, %v343
        %v612 = vadd.f32 %v610, %v611
        %v613 = vmul.f32 %v604, %v348
        %v614 = vadd.f32 %v612, %v613
        %v615 = vpack.c.bf16 %v614, %v614
        %v616 = vlaneseq
        %v617 = vshrl.u32 %v616, 7
        %v618 = vsub.s32 2, %v617
        %v619 = vrot.slane %v369, %v618
        %v624 = vunpack.c.l.b16 %v353
        %v625 = vunpack.c.l.b16 %v354
        %v626 = vunpack.c.l.b16 %v355
        %v627 = vunpack.c.l.b16 %v356
        %v628 = vpack.c.b16 %v625, %v624
        %v629 = vpack.c.b16 %v627, %v626
        %v633 = vsel %vm387, %v615, 0
        %635 = vmatprep.subr.bf16.mxu0 0
        %636 = vmatpush1.bf16.msra.mxu0 %v628
        %637 = vmatprep.subr.bf16.mxu0 0
        %638 = vmatpush1.bf16.msra.mxu0 %v629
        %639 = vmatprep.subr.bf16.mxu0 0
        %640 = vmatpush1.bf16.msra.mxu0 0
        %641 = vmatprep.subr.bf16.mxu0 0
        %642 = vmatpush1.bf16.msra.mxu0 0
        %643 = vmatprep.subr.bf16.mxu0 0
        %644 = vmatpush1.bf16.msra.mxu0 0
        %645 = vmatprep.subr.bf16.mxu0 0
        %646 = vmatpush1.bf16.msra.mxu0 0
        %647 = vmatprep.subr.bf16.mxu0 0
        %648 = vmatpush1.bf16.msra.mxu0 0
        %649 = vmatprep.subr.bf16.mxu0 0
        %650 = vmatpush1.bf16.msra.mxu0 0
        %651 = vmatprep.subr.bf16.mxu0 0
        %652 = vmatpush1.bf16.msra.mxu0 0
        %653 = vmatprep.subr.bf16.mxu0 0
        %654 = vmatpush1.bf16.msra.mxu0 0
        %655 = vmatprep.subr.bf16.mxu0 0
        %656 = vmatpush1.bf16.msra.mxu0 0
        %657 = vmatprep.subr.bf16.mxu0 0
        %658 = vmatpush1.bf16.msra.mxu0 0
        %659 = vmatprep.subr.bf16.mxu0 0
        %660 = vmatpush1.bf16.msra.mxu0 0
        %661 = vmatprep.subr.bf16.mxu0 0
        %662 = vmatpush1.bf16.msra.mxu0 0
        %663 = vmatprep.subr.bf16.mxu0 0
        %664 = vmatpush1.bf16.msra.mxu0 0
        %665 = vmatprep.subr.bf16.mxu0 0
        %666 = vmatpush1.bf16.msra.mxu0 0
        %667 = vmatprep.mubr.bf16.mxu0 0
        %668 = vmatmul.mubr.bf16.gmra.mrb[0].mxu0 %v633
        %v669 = vpop.f32.mrb[0].mxu0
        %v670 = vadd.f32 %v619, %v669
        %v671 = vpop.f32.mrb[0].mxu0
        %v672 = vpop.f32.mrb[0].mxu0
        %v673 = vpop.f32.mrb[0].mxu0
        %674 = vdwg.mxu0
        %v675 = vadd.f32 %v670, %v326
        %v676 = vsel %vm387, %v675, 0.0
        %677 = vadd.xlane.f32.xlu0 %v676
        %v678 = vpop.xlane.xlu0 %677
        %v679 = vrcp.pop 32.0
        %v680 = vmul.f32 %v678, %v679
        %v681 = vsub.f32 %v675, %v680
        %v682 = vmul.f32 %v681, %v681
        %v683 = vsel %vm387, %v682, 0.0
        %684 = vadd.xlane.f32.xlu0 %v683
        %v685 = vpop.xlane.xlu0 %684
        %v686 = vmul.f32 %v685, %v679
        %v687 = vadd.f32 %v686, 1e-05
        %v688 = vrsqrt.pop %v687
        %v689 = vmul.f32 %v681, %v688
        %v690 = vlaneseq
        %v691 = vshrl.u32 %v690, 7
        %v692 = vsub.s32 4, %v691
        %v693 = vrot.slane %v369, %v692
        %v694 = vmul.f32 %v689, %v693
        %v695 = vlaneseq
        %v696 = vshrl.u32 %v695, 7
        %v697 = vsub.s32 5, %v696
        %v698 = vrot.slane %v369, %v697
        %v699 = vadd.f32 %v694, %v698
        %v700 = vpack.c.bf16 %v699, %v699
        %v701 = vlaneseq
        %v702 = vshrl.u32 %v701, 7
        %v703 = vsub.s32 1, %v702
        %v704 = vrot.slane %v369, %v703
        %v709 = vunpack.c.l.b16 %v357
        %v710 = vunpack.c.l.b16 %v358
        %v711 = vunpack.c.l.b16 %v359
        %v712 = vunpack.c.l.b16 %v360
        %v713 = vpack.c.b16 %v710, %v709
        %v714 = vpack.c.b16 %v712, %v711
        %v718 = vsel %vm387, %v700, 0
        %720 = vmatprep.subr.bf16.mxu0 0
        %721 = vmatpush1.bf16.msra.mxu0 %v713
        %722 = vmatprep.subr.bf16.mxu0 0
        %723 = vmatpush1.bf16.msra.mxu0 %v714
        %724 = vmatprep.subr.bf16.mxu0 0
        %725 = vmatpush1.bf16.msra.mxu0 0
        %726 = vmatprep.subr.bf16.mxu0 0
        %727 = vmatpush1.bf16.msra.mxu0 0
        %728 = vmatprep.subr.bf16.mxu0 0
        %729 = vmatpush1.bf16.msra.mxu0 0
        %730 = vmatprep.subr.bf16.mxu0 0
        %731 = vmatpush1.bf16.msra.mxu0 0
        %732 = vmatprep.subr.bf16.mxu0 0
        %733 = vmatpush1.bf16.msra.mxu0 0
        %734 = vmatprep.subr.bf16.mxu0 0
        %735 = vmatpush1.bf16.msra.mxu0 0
        %736 = vmatprep.subr.bf16.mxu0 0
        %737 = vmatpush1.bf16.msra.mxu0 0
        %738 = vmatprep.subr.bf16.mxu0 0
        %739 = vmatpush1.bf16.msra.mxu0 0
        %740 = vmatprep.subr.bf16.mxu0 0
        %741 = vmatpush1.bf16.msra.mxu0 0
        %742 = vmatprep.subr.bf16.mxu0 0
        %743 = vmatpush1.bf16.msra.mxu0 0
        %744 = vmatprep.subr.bf16.mxu0 0
        %745 = vmatpush1.bf16.msra.mxu0 0
        %746 = vmatprep.subr.bf16.mxu0 0
        %747 = vmatpush1.bf16.msra.mxu0 0
        %748 = vmatprep.subr.bf16.mxu0 0
        %749 = vmatpush1.bf16.msra.mxu0 0
        %750 = vmatprep.subr.bf16.mxu0 0
        %751 = vmatpush1.bf16.msra.mxu0 0
        %752 = vmatprep.mubr.bf16.mxu0 0
        %753 = vmatmul.mubr.bf16.gmra.mrb[0].mxu0 %v718
        %v754 = vpop.f32.mrb[0].mxu0
        %v755 = vadd.f32 %v704, %v754
        %v756 = vpop.f32.mrb[0].mxu0
        %v757 = vpop.f32.mrb[0].mxu0
        %v758 = vpop.f32.mrb[0].mxu0
        %759 = vdwg.mxu0
        %v760 = vmax.f32 %v755, 0.0
        %v761 = vpack.c.bf16 %v760, %v760
        %v762 = vlaneseq
        %v763 = vshrl.u32 %v762, 7
        %v764 = vsub.s32 3, %v763
        %v765 = vrot.slane %v369, %v764
        %v774 = vunpack.c.l.b16 %v361
        %v775 = vunpack.c.l.b16 %v362
        %v776 = vunpack.c.l.b16 %v363
        %v777 = vunpack.c.l.b16 %v364
        %v778 = vunpack.c.l.b16 %v365
        %v779 = vunpack.c.l.b16 %v366
        %v780 = vunpack.c.l.b16 %v367
        %v781 = vunpack.c.l.b16 %v368
        %v782 = vpack.c.b16 %v775, %v774
        %v783 = vpack.c.b16 %v777, %v776
        %v784 = vpack.c.b16 %v779, %v778
        %v785 = vpack.c.b16 %v781, %v780
        %vm790 = vcmask 523264
        %v792 = vsel %vm790, %v761, 0
        %794 = vmatprep.subr.bf16.mxu0 0
        %795 = vmatpush1.bf16.msra.mxu0 %v782
        %796 = vmatprep.subr.bf16.mxu0 0
        %797 = vmatpush1.bf16.msra.mxu0 %v783
        %798 = vmatprep.subr.bf16.mxu0 0
        %799 = vmatpush1.bf16.msra.mxu0 %v784
        %800 = vmatprep.subr.bf16.mxu0 0
        %801 = vmatpush1.bf16.msra.mxu0 %v785
        %802 = vmatprep.subr.bf16.mxu0 0
        %803 = vmatpush1.bf16.msra.mxu0 0
        %804 = vmatprep.subr.bf16.mxu0 0
        %805 = vmatpush1.bf16.msra.mxu0 0
        %806 = vmatprep.subr.bf16.mxu0 0
        %807 = vmatpush1.bf16.msra.mxu0 0
        %808 = vmatprep.subr.bf16.mxu0 0
        %809 = vmatpush1.bf16.msra.mxu0 0
        %810 = vmatprep.subr.bf16.mxu0 0
        %811 = vmatpush1.bf16.msra.mxu0 0
        %812 = vmatprep.subr.bf16.mxu0 0
        %813 = vmatpush1.bf16.msra.mxu0 0
        %814 = vmatprep.subr.bf16.mxu0 0
        %815 = vmatpush1.bf16.msra.mxu0 0
        %816 = vmatprep.subr.bf16.mxu0 0
        %817 = vmatpush1.bf16.msra.mxu0 0
        %818 = vmatprep.subr.bf16.mxu0 0
        %819 = vmatpush1.bf16.msra.mxu0 0
        %820 = vmatprep.subr.bf16.mxu0 0
        %821 = vmatpush1.bf16.msra.mxu0 0
        %822 = vmatprep.subr.bf16.mxu0 0
        %823 = vmatpush1.bf16.msra.mxu0 0
        %824 = vmatprep.subr.bf16.mxu0 0
        %825 = vmatpush1.bf16.msra.mxu0 0
        %826 = vmatprep.mubr.bf16.mxu0 0
        %827 = vmatmul.mubr.bf16.gmra.mrb[0].mxu0 %v792
        %v828 = vpop.f32.mrb[0].mxu0
        %v829 = vadd.f32 %v765, %v828
        %v830 = vpop.f32.mrb[0].mxu0
        %v831 = vpop.f32.mrb[0].mxu0
        %v832 = vpop.f32.mrb[0].mxu0
        %833 = vdwg.mxu0
        %v834 = vadd.f32 %v829, %v699
        %v835 = vsel %vm387, %v834, 0.0
        %836 = vadd.xlane.f32.xlu0 %v835
        %v837 = vpop.xlane.xlu0 %836
        %v838 = vmul.f32 %v837, %v679
        %v839 = vsub.f32 %v834, %v838
        %v840 = vmul.f32 %v839, %v839
        %v841 = vsel %vm387, %v840, 0.0
        %842 = vadd.xlane.f32.xlu0 %v841
        %v843 = vpop.xlane.xlu0 %842
        %v844 = vmul.f32 %v843, %v679
        %v845 = vadd.f32 %v844, 1e-05
        %v846 = vrsqrt.pop %v845
        %v847 = vmul.f32 %v839, %v846
        %v848 = vlaneseq
        %v849 = vshrl.u32 %v848, 7
        %v850 = vsub.s32 6, %v849
        %v851 = vrot.slane %v369, %v850
        %v852 = vmul.f32 %v847, %v851
        %v853 = vlaneseq
        %v854 = vshrl.u32 %v853, 7
        %v855 = vsub.s32 7, %v854
        %v856 = vrot.slane %v369, %v855
        %v857 = vadd.f32 %v852, %v856
        %s858 = scalar_lea.vmem [#allocation5], 16
        %v859 = vld [vmem:[%s858] sm:$0xf]
        %v860 = vld [vmem:[%s858 + $0x4] sm:$0xf]
        %v861 = vld [vmem:[%s858 + $0x8] sm:$0xf]
        %v862 = vld [vmem:[%s858 + $0xc] sm:$0xf]
        %s863 = scalar_lea.vmem [#allocation7], 16
        %v864 = vld [vmem:[%s863] sm:$0xf]
        %v865 = vld [vmem:[%s863 + $0x4] sm:$0xf]
        %v866 = vld [vmem:[%s863 + $0x8] sm:$0xf]
        %v867 = vld [vmem:[%s863 + $0xc] sm:$0xf]
        %s868 = scalar_lea.vmem %s3, 16
        %v869 = vld [vmem:[%s868] sm:$0xf]
        %v870 = vld [vmem:[%s868 + $0x4] sm:$0xf]
        %v871 = vld [vmem:[%s868 + $0x8] sm:$0xf]
        %v872 = vld [vmem:[%s868 + $0xc] sm:$0xf]
        %s873 = scalar_lea.vmem [#allocation8], 32
        %v874 = vld [vmem:[%s873] sm:$0xf]
        %v875 = vld [vmem:[%s873 + $0x4] sm:$0xf]
        %v876 = vld [vmem:[%s873 + $0x8] sm:$0xf]
        %v877 = vld [vmem:[%s873 + $0xc] sm:$0xf]
        %v878 = vld [vmem:[%s873 + $0x10] sm:$0xf]
        %v879 = vld [vmem:[%s873 + $0x14] sm:$0xf]
        %v880 = vld [vmem:[%s873 + $0x18] sm:$0xf]
        %v881 = vld [vmem:[%s873 + $0x1c] sm:$0xf]
        %s882 = scalar_lea.vmem [#allocation10], 8
        %v883 = vld [vmem:[%s882] sm:$0xff]
        %v884 = vpack.c.bf16 %v857, %v857
        %v885 = vlaneseq
        %v886 = vshrl.u32 %v885, 7
        %v887 = vsub.s32 0, %v886
        %v888 = vrot.slane %v883, %v887
        %v893 = vunpack.c.l.b16 %v859
        %v894 = vunpack.c.l.b16 %v860
        %v895 = vunpack.c.l.b16 %v861
        %v896 = vunpack.c.l.b16 %v862
        %v897 = vpack.c.b16 %v894, %v893
        %v898 = vpack.c.b16 %v896, %v895
        %v902 = vsel %vm387, %v884, 0
        %904 = vmatprep.subr.bf16.mxu0 0
        %905 = vmatpush1.bf16.msra.mxu0 %v897
        %906 = vmatprep.subr.bf16.mxu0 0
        %907 = vmatpush1.bf16.msra.mxu0 %v898
        %908 = vmatprep.subr.bf16.mxu0 0
        %909 = vmatpush1.bf16.msra.mxu0 0
        %910 = vmatprep.subr.bf16.mxu0 0
        %911 = vmatpush1.bf16.msra.mxu0 0
        %912 = vmatprep.subr.bf16.mxu0 0
        %913 = vmatpush1.bf16.msra.mxu0 0
        %914 = vmatprep.subr.bf16.mxu0 0
        %915 = vmatpush1.bf16.msra.mxu0 0
        %916 = vmatprep.subr.bf16.mxu0 0
        %917 = vmatpush1.bf16.msra.mxu0 0
        %918 = vmatprep.subr.bf16.mxu0 0
        %919 = vmatpush1.bf16.msra.mxu0 0
        %920 = vmatprep.subr.bf16.mxu0 0
        %921 = vmatpush1.bf16.msra.mxu0 0
        %922 = vmatprep.subr.bf16.mxu0 0
        %923 = vmatpush1.bf16.msra.mxu0 0
        %924 = vmatprep.subr.bf16.mxu0 0
        %925 = vmatpush1.bf16.msra.mxu0 0
        %926 = vmatprep.subr.bf16.mxu0 0
        %927 = vmatpush1.bf16.msra.mxu0 0
        %928 = vmatprep.subr.bf16.mxu0 0
        %929 = vmatpush1.bf16.msra.mxu0 0
        %930 = vmatprep.subr.bf16.mxu0 0
        %931 = vmatpush1.bf16.msra.mxu0 0
        %932 = vmatprep.subr.bf16.mxu0 0
        %933 = vmatpush1.bf16.msra.mxu0 0
        %934 = vmatprep.subr.bf16.mxu0 0
        %935 = vmatpush1.bf16.msra.mxu0 0
        %936 = vmatprep.mubr.bf16.mxu0 0
        %937 = vmatmul.mubr.bf16.gmra.mrb[0].mxu0 %v902
        %v938 = vpop.f32.mrb[0].mxu0
        %v939 = vadd.f32 %v888, %v938
        %v940 = vpop.f32.mrb[0].mxu0
        %v941 = vpop.f32.mrb[0].mxu0
        %v942 = vpop.f32.mrb[0].mxu0
        %943 = vdwg.mxu0
        %v944 = vmul.f32 %v939, %v333
        %v945 = vmul.f32 %v939, %v338
        %v946 = vmul.f32 %v939, %v343
        %v947 = vmul.f32 %v939, %v348
        %v948 = vpack.c.bf16 %v945, %v944
        %v949 = vpack.c.bf16 %v947, %v946
        %v950 = vpack.c.bf16 %v939, %v939
        %952 = vrot.lane.b32.xlu0 %v950, 96
        %v953 = vpop.permute.xlu0 %952
        %v955 = vsel %vm387, %v948, 0
        %v958 = vsel %vm387, %v949, 0
        %v961 = vsel %vm387, %v953, 0
        %963 = vmatprep.subr.bf16.mxu0 0
        %964 = vmatpush1.bf16.xpose.msra.mxu0 %v961
        %965 = vmatprep.subr.bf16.mxu0 0
        %966 = vmatpush1.bf16.xpose.msra.mxu0 0
        %967 = vmatprep.subr.bf16.mxu0 0
        %968 = vmatpush1.bf16.xpose.msra.mxu0 0
        %969 = vmatprep.subr.bf16.mxu0 0
        %970 = vmatpush1.bf16.xpose.msra.mxu0 0
        %971 = vmatprep.subr.bf16.mxu0 0
        %972 = vmatpush1.bf16.xpose.msra.mxu0 0
        %973 = vmatprep.subr.bf16.mxu0 0
        %974 = vmatpush1.bf16.xpose.msra.mxu0 0
        %975 = vmatprep.subr.bf16.mxu0 0
        %976 = vmatpush1.bf16.xpose.msra.mxu0 0
        %977 = vmatprep.subr.bf16.mxu0 0
        %978 = vmatpush1.bf16.xpose.msra.mxu0 0
        %979 = vmatprep.subr.bf16.mxu0 0
        %980 = vmatpush1.bf16.xpose.msra.mxu0 0
        %981 = vmatprep.subr.bf16.mxu0 0
        %982 = vmatpush1.bf16.xpose.msra.mxu0 0
        %983 = vmatprep.subr.bf16.mxu0 0
        %984 = vmatpush1.bf16.xpose.msra.mxu0 0
        %985 = vmatprep.subr.bf16.mxu0 0
        %986 = vmatpush1.bf16.xpose.msra.mxu0 0
        %987 = vmatprep.subr.bf16.mxu0 0
        %988 = vmatpush1.bf16.xpose.msra.mxu0 0
        %989 = vmatprep.subr.bf16.mxu0 0
        %990 = vmatpush1.bf16.xpose.msra.mxu0 0
        %991 = vmatprep.subr.bf16.mxu0 0
        %992 = vmatpush1.bf16.xpose.msra.mxu0 0
        %993 = vmatprep.subr.bf16.mxu0 0
        %994 = vmatpush1.bf16.xpose.msra.mxu0 0
        %995 = vmatprep.mubr.bf16.mxu0 0
        %996 = vmatmul.mubr.bf16.gmra.mrb[0].mxu0 %v955
        %v997 = vpop.f32.mrb[0].mxu0
        %v998 = vadd.f32 0.0, %v997
        %v999 = vpop.f32.mrb[0].mxu0
        %v1000 = vpop.f32.mrb[0].mxu0
        %v1001 = vadd.f32 0.0, %v1000
        %v1002 = vpop.f32.mrb[0].mxu0
        %1003 = vmatprep.mubr.bf16.mxu0 0
        %1004 = vmatmul.mubr.bf16.gmra.mrb[0].mxu0 %v958
        %v1005 = vpop.f32.mrb[0].mxu0
        %v1006 = vadd.f32 0.0, %v1005
        %v1007 = vpop.f32.mrb[0].mxu0
        %v1008 = vpop.f32.mrb[0].mxu0
        %v1009 = vadd.f32 0.0, %v1008
        %v1010 = vpop.f32.mrb[0].mxu0
        %1011 = vdwg.mxu0
        %v1012 = vsel %vm499, %v998, -inf
        %1013 = vmax.xlane.f32.xlu0 %v1012
        %v1014 = vpop.xlane.xlu0 %1013
        %v1015 = vsel %vm499, %v1001, -inf
        %1016 = vmax.xlane.f32.xlu0 %v1015
        %v1017 = vpop.xlane.xlu0 %1016
        %v1018 = vsel %vm499, %v1006, -inf
        %1019 = vmax.xlane.f32.xlu0 %v1018
        %v1020 = vpop.xlane.xlu0 %1019
        %v1021 = vsel %vm499, %v1009, -inf
        %1022 = vmax.xlane.f32.xlu0 %v1021
        %v1023 = vpop.xlane.xlu0 %1022
        %v1024 = vsub.f32 %v998, %v1014
        %v1025 = vsub.f32 %v1001, %v1017
        %v1026 = vsub.f32 %v1006, %v1020
        %v1027 = vsub.f32 %v1009, %v1023
        %v1028 = vmul.f32 %v1024, 1.442695
        %v1029 = vpow.pop %v1028
        %v1030 = vmul.f32 %v1025, 1.442695
        %v1031 = vpow.pop %v1030
        %v1032 = vmul.f32 %v1026, 1.442695
        %v1033 = vpow.pop %v1032
        %v1034 = vmul.f32 %v1027, 1.442695
        %v1035 = vpow.pop %v1034
        %v1036 = vsel %vm499, %v1029, 0.0
        %1037 = vadd.xlane.f32.xlu0 %v1036
        %v1038 = vpop.xlane.xlu0 %1037
        %v1039 = vsel %vm499, %v1031, 0.0
        %1040 = vadd.xlane.f32.xlu0 %v1039
        %v1041 = vpop.xlane.xlu0 %1040
        %v1042 = vsel %vm499, %v1033, 0.0
        %1043 = vadd.xlane.f32.xlu0 %v1042
        %v1044 = vpop.xlane.xlu0 %1043
        %v1045 = vsel %vm499, %v1035, 0.0
        %1046 = vadd.xlane.f32.xlu0 %v1045
        %v1047 = vpop.xlane.xlu0 %1046
        %v1048 = vrcp.pop %v1038
        %v1049 = vrcp.pop %v1041
        %v1050 = vrcp.pop %v1044
        %v1051 = vrcp.pop %v1047
        %v1052 = vmul.f32 %v1029, %v1048
        %v1053 = vmul.f32 %v1031, %v1049
        %v1054 = vmul.f32 %v1033, %v1050
        %v1055 = vmul.f32 %v1035, %v1051
        %v1056 = vpack.c.bf16 %v1053, %v1052
        %v1057 = vpack.c.bf16 %v1055, %v1054
        %1058 = vrot.lane.b32.xlu0 %v950, 64
        %v1059 = vpop.permute.xlu0 %1058
        %v1061 = vsel %vm499, %v1056, 0
        %v1064 = vsel %vm499, %v1057, 0
        %v1067 = vsel %vm554, %v1059, 0
        %1069 = vmatprep.subr.bf16.mxu0 0
        %1070 = vmatpush1.bf16.msra.mxu0 %v1067
        %1071 = vmatprep.subr.bf16.mxu0 0
        %1072 = vmatpush1.bf16.msra.mxu0 0
        %1073 = vmatprep.subr.bf16.mxu0 0
        %1074 = vmatpush1.bf16.msra.mxu0 0
        %1075 = vmatprep.subr.bf16.mxu0 0
        %1076 = vmatpush1.bf16.msra.mxu0 0
        %1077 = vmatprep.subr.bf16.mxu0 0
        %1078 = vmatpush1.bf16.msra.mxu0 0
        %1079 = vmatprep.subr.bf16.mxu0 0
        %1080 = vmatpush1.bf16.msra.mxu0 0
        %1081 = vmatprep.subr.bf16.mxu0 0
        %1082 = vmatpush1.bf16.msra.mxu0 0
        %1083 = vmatprep.subr.bf16.mxu0 0
        %1084 = vmatpush1.bf16.msra.mxu0 0
        %1085 = vmatprep.subr.bf16.mxu0 0
        %1086 = vmatpush1.bf16.msra.mxu0 0
        %1087 = vmatprep.subr.bf16.mxu0 0
        %1088 = vmatpush1.bf16.msra.mxu0 0
        %1089 = vmatprep.subr.bf16.mxu0 0
        %1090 = vmatpush1.bf16.msra.mxu0 0
        %1091 = vmatprep.subr.bf16.mxu0 0
        %1092 = vmatpush1.bf16.msra.mxu0 0
        %1093 = vmatprep.subr.bf16.mxu0 0
        %1094 = vmatpush1.bf16.msra.mxu0 0
        %1095 = vmatprep.subr.bf16.mxu0 0
        %1096 = vmatpush1.bf16.msra.mxu0 0
        %1097 = vmatprep.subr.bf16.mxu0 0
        %1098 = vmatpush1.bf16.msra.mxu0 0
        %1099 = vmatprep.subr.bf16.mxu0 0
        %1100 = vmatpush1.bf16.msra.mxu0 0
        %1101 = vmatprep.mubr.bf16.mxu0 0
        %1102 = vmatmul.mubr.bf16.gmra.mrb[0].mxu0 %v1061
        %v1103 = vpop.f32.mrb[0].mxu0
        %v1104 = vadd.f32 0.0, %v1103
        %v1105 = vpop.f32.mrb[0].mxu0
        %v1106 = vpop.f32.mrb[0].mxu0
        %v1107 = vadd.f32 0.0, %v1106
        %v1108 = vpop.f32.mrb[0].mxu0
        %1109 = vmatprep.mubr.bf16.mxu0 0
        %1110 = vmatmul.mubr.bf16.gmra.mrb[0].mxu0 %v1064
        %v1111 = vpop.f32.mrb[0].mxu0
        %v1112 = vadd.f32 0.0, %v1111
        %v1113 = vpop.f32.mrb[0].mxu0
        %v1114 = vpop.f32.mrb[0].mxu0
        %v1115 = vadd.f32 0.0, %v1114
        %v1116 = vpop.f32.mrb[0].mxu0
        %1117 = vdwg.mxu0
        %v1118 = vmul.f32 %v1104, %v333
        %v1119 = vadd.f32 %v1118, 0.0
        %v1120 = vmul.f32 %v1107, %v338
        %v1121 = vadd.f32 %v1119, %v1120
        %v1122 = vmul.f32 %v1112, %v343
        %v1123 = vadd.f32 %v1121, %v1122
        %v1124 = vmul.f32 %v1115, %v348
        %v1125 = vadd.f32 %v1123, %v1124
        %v1126 = vpack.c.bf16 %v1125, %v1125
        %v1127 = vlaneseq
        %v1128 = vshrl.u32 %v1127, 7
        %v1129 = vsub.s32 2, %v1128
        %v1130 = vrot.slane %v883, %v1129
        %v1135 = vunpack.c.l.b16 %v864
        %v1136 = vunpack.c.l.b16 %v865
        %v1137 = vunpack.c.l.b16 %v866
        %v1138 = vunpack.c.l.b16 %v867
        %v1139 = vpack.c.b16 %v1136, %v1135
        %v1140 = vpack.c.b16 %v1138, %v1137
        %v1144 = vsel %vm387, %v1126, 0
        %1146 = vmatprep.subr.bf16.mxu0 0
        %1147 = vmatpush1.bf16.msra.mxu0 %v1139
        %1148 = vmatprep.subr.bf16.mxu0 0
        %1149 = vmatpush1.bf16.msra.mxu0 %v1140
        %1150 = vmatprep.subr.bf16.mxu0 0
        %1151 = vmatpush1.bf16.msra.mxu0 0
        %1152 = vmatprep.subr.bf16.mxu0 0
        %1153 = vmatpush1.bf16.msra.mxu0 0
        %1154 = vmatprep.subr.bf16.mxu0 0
        %1155 = vmatpush1.bf16.msra.mxu0 0
        %1156 = vmatprep.subr.bf16.mxu0 0
        %1157 = vmatpush1.bf16.msra.mxu0 0
        %1158 = vmatprep.subr.bf16.mxu0 0
        %1159 = vmatpush1.bf16.msra.mxu0 0
        %1160 = vmatprep.subr.bf16.mxu0 0
        %1161 = vmatpush1.bf16.msra.mxu0 0
        %1162 = vmatprep.subr.bf16.mxu0 0
        %1163 = vmatpush1.bf16.msra.mxu0 0
        %1164 = vmatprep.subr.bf16.mxu0 0
        %1165 = vmatpush1.bf16.msra.mxu0 0
        %1166 = vmatprep.subr.bf16.mxu0 0
        %1167 = vmatpush1.bf16.msra.mxu0 0
        %1168 = vmatprep.subr.bf16.mxu0 0
        %1169 = vmatpush1.bf16.msra.mxu0 0
        %1170 = vmatprep.subr.bf16.mxu0 0
        %1171 = vmatpush1.bf16.msra.mxu0 0
        %1172 = vmatprep.subr.bf16.mxu0 0
        %1173 = vmatpush1.bf16.msra.mxu0 0
        %1174 = vmatprep.subr.bf16.mxu0 0
        %1175 = vmatpush1.bf16.msra.mxu0 0
        %1176 = vmatprep.subr.bf16.mxu0 0
        %1177 = vmatpush1.bf16.msra.mxu0 0
        %1178 = vmatprep.mubr.bf16.mxu0 0
        %1179 = vmatmul.mubr.bf16.gmra.mrb[0].mxu0 %v1144
        %v1180 = vpop.f32.mrb[0].mxu0
        %v1181 = vadd.f32 %v1130, %v1180
        %v1182 = vpop.f32.mrb[0].mxu0
        %v1183 = vpop.f32.mrb[0].mxu0
        %v1184 = vpop.f32.mrb[0].mxu0
        %1185 = vdwg.mxu0
        %v1186 = vadd.f32 %v1181, %v857
        %v1187 = vsel %vm387, %v1186, 0.0
        %1188 = vadd.xlane.f32.xlu0 %v1187
        %v1189 = vpop.xlane.xlu0 %1188
        %v1190 = vmul.f32 %v1189, %v679
        %v1191 = vsub.f32 %v1186, %v1190
        %v1192 = vmul.f32 %v1191, %v1191
        %v1193 = vsel %vm387, %v1192, 0.0
        %1194 = vadd.xlane.f32.xlu0 %v1193
        %v1195 = vpop.xlane.xlu0 %1194
        %v1196 = vmul.f32 %v1195, %v679
        %v1197 = vadd.f32 %v1196, 1e-05
        %v1198 = vrsqrt.pop %v1197
        %v1199 = vmul.f32 %v1191, %v1198
        %v1200 = vlaneseq
        %v1201 = vshrl.u32 %v1200, 7
        %v1202 = vsub.s32 4, %v1201
        %v1203 = vrot.slane %v883, %v1202
        %v1204 = vmul.f32 %v1199, %v1203
        %v1205 = vlaneseq
        %v1206 = vshrl.u32 %v1205, 7
        %v1207 = vsub.s32 5, %v1206
        %v1208 = vrot.slane %v883, %v1207
        %v1209 = vadd.f32 %v1204, %v1208
        %v1210 = vpack.c.bf16 %v1209, %v1209
        %v1211 = vlaneseq
        %v1212 = vshrl.u32 %v1211, 7
        %v1213 = vsub.s32 1, %v1212
        %v1214 = vrot.slane %v883, %v1213
        %v1219 = vunpack.c.l.b16 %v869
        %v1220 = vunpack.c.l.b16 %v870
        %v1221 = vunpack.c.l.b16 %v871
        %v1222 = vunpack.c.l.b16 %v872
        %v1223 = vpack.c.b16 %v1220, %v1219
        %v1224 = vpack.c.b16 %v1222, %v1221
        %v1228 = vsel %vm387, %v1210, 0
        %1230 = vmatprep.subr.bf16.mxu0 0
        %1231 = vmatpush1.bf16.msra.mxu0 %v1223
        %1232 = vmatprep.subr.bf16.mxu0 0
        %1233 = vmatpush1.bf16.msra.mxu0 %v1224
        %1234 = vmatprep.subr.bf16.mxu0 0
        %1235 = vmatpush1.bf16.msra.mxu0 0
        %1236 = vmatprep.subr.bf16.mxu0 0
        %1237 = vmatpush1.bf16.msra.mxu0 0
        %1238 = vmatprep.subr.bf16.mxu0 0
        %1239 = vmatpush1.bf16.msra.mxu0 0
        %1240 = vmatprep.subr.bf16.mxu0 0
        %1241 = vmatpush1.bf16.msra.mxu0 0
        %1242 = vmatprep.subr.bf16.mxu0 0
        %1243 = vmatpush1.bf16.msra.mxu0 0
        %1244 = vmatprep.subr.bf16.mxu0 0
        %1245 = vmatpush1.bf16.msra.mxu0 0
        %1246 = vmatprep.subr.bf16.mxu0 0
        %1247 = vmatpush1.bf16.msra.mxu0 0
        %1248 = vmatprep.subr.bf16.mxu0 0
        %1249 = vmatpush1.bf16.msra.mxu0 0
        %1250 = vmatprep.subr.bf16.mxu0 0
        %1251 = vmatpush1.bf16.msra.mxu0 0
        %1252 = vmatprep.subr.bf16.mxu0 0
        %1253 = vmatpush1.bf16.msra.mxu0 0
        %1254 = vmatprep.subr.bf16.mxu0 0
        %1255 = vmatpush1.bf16.msra.mxu0 0
        %1256 = vmatprep.subr.bf16.mxu0 0
        %1257 = vmatpush1.bf16.msra.mxu0 0
        %1258 = vmatprep.subr.bf16.mxu0 0
        %1259 = vmatpush1.bf16.msra.mxu0 0
        %1260 = vmatprep.subr.bf16.mxu0 0
        %1261 = vmatpush1.bf16.msra.mxu0 0
        %1262 = vmatprep.mubr.bf16.mxu0 0
        %1263 = vmatmul.mubr.bf16.gmra.mrb[0].mxu0 %v1228
        %v1264 = vpop.f32.mrb[0].mxu0
        %v1265 = vadd.f32 %v1214, %v1264
        %v1266 = vpop.f32.mrb[0].mxu0
        %v1267 = vpop.f32.mrb[0].mxu0
        %v1268 = vpop.f32.mrb[0].mxu0
        %1269 = vdwg.mxu0
        %v1270 = vmax.f32 %v1265, 0.0
        %v1271 = vpack.c.bf16 %v1270, %v1270
        %v1272 = vlaneseq
        %v1273 = vshrl.u32 %v1272, 7
        %v1274 = vsub.s32 3, %v1273
        %v1275 = vrot.slane %v883, %v1274
        %v1284 = vunpack.c.l.b16 %v874
        %v1285 = vunpack.c.l.b16 %v875
        %v1286 = vunpack.c.l.b16 %v876
        %v1287 = vunpack.c.l.b16 %v877
        %v1288 = vunpack.c.l.b16 %v878
        %v1289 = vunpack.c.l.b16 %v879
        %v1290 = vunpack.c.l.b16 %v880
        %v1291 = vunpack.c.l.b16 %v881
        %v1292 = vpack.c.b16 %v1285, %v1284
        %v1293 = vpack.c.b16 %v1287, %v1286
        %v1294 = vpack.c.b16 %v1289, %v1288
        %v1295 = vpack.c.b16 %v1291, %v1290
        %v1301 = vsel %vm790, %v1271, 0
        %1303 = vmatprep.subr.bf16.mxu0 0
        %1304 = vmatpush1.bf16.msra.mxu0 %v1292
        %1305 = vmatprep.subr.bf16.mxu0 0
        %1306 = vmatpush1.bf16.msra.mxu0 %v1293
        %1307 = vmatprep.subr.bf16.mxu0 0
        %1308 = vmatpush1.bf16.msra.mxu0 %v1294
        %1309 = vmatprep.subr.bf16.mxu0 0
        %1310 = vmatpush1.bf16.msra.mxu0 %v1295
        %1311 = vmatprep.subr.bf16.mxu0 0
        %1312 = vmatpush1.bf16.msra.mxu0 0
        %1313 = vmatprep.subr.bf16.mxu0 0
        %1314 = vmatpush1.bf16.msra.mxu0 0
        %1315 = vmatprep.subr.bf16.mxu0 0
        %1316 = vmatpush1.bf16.msra.mxu0 0
        %1317 = vmatprep.subr.bf16.mxu0 0
        %1318 = vmatpush1.bf16.msra.mxu0 0
        %1319 = vmatprep.subr.bf16.mxu0 0
        %1320 = vmatpush1.bf16.msra.mxu0 0
        %1321 = vmatprep.subr.bf16.mxu0 0
        %1322 = vmatpush1.bf16.msra.mxu0 0
        %1323 = vmatprep.subr.bf16.mxu0 0
        %1324 = vmatpush1.bf16.msra.mxu0 0
        %1325 = vmatprep.subr.bf16.mxu0 0
        %1326 = vmatpush1.bf16.msra.mxu0 0
        %1327 = vmatprep.subr.bf16.mxu0 0
        %1328 = vmatpush1.bf16.msra.mxu0 0
        %1329 = vmatprep.subr.bf16.mxu0 0
        %1330 = vmatpush1.bf16.msra.mxu0 0
        %1331 = vmatprep.subr.bf16.mxu0 0
        %1332 = vmatpush1.bf16.msra.mxu0 0
        %1333 = vmatprep.subr.bf16.mxu0 0
        %1334 = vmatpush1.bf16.msra.mxu0 0
        %1335 = vmatprep.mubr.bf16.mxu0 0
        %1336 = vmatmul.mubr.bf16.gmra.mrb[0].mxu0 %v1301
        %v1337 = vpop.f32.mrb[0].mxu0
        %v1338 = vadd.f32 %v1275, %v1337
        %v1339 = vpop.f32.mrb[0].mxu0
        %v1340 = vpop.f32.mrb[0].mxu0
        %v1341 = vpop.f32.mrb[0].mxu0
        %1342 = vdwg.mxu0
        %v1343 = vadd.f32 %v1338, %v1209
        %v1344 = vsel %vm387, %v1343, 0.0
        %1345 = vadd.xlane.f32.xlu0 %v1344
        %v1346 = vpop.xlane.xlu0 %1345
        %v1347 = vmul.f32 %v1346, %v679
        %v1348 = vsub.f32 %v1343, %v1347
        %v1349 = vmul.f32 %v1348, %v1348
        %v1350 = vsel %vm387, %v1349, 0.0
        %1351 = vadd.xlane.f32.xlu0 %v1350
        %v1352 = vpop.xlane.xlu0 %1351
        %v1353 = vmul.f32 %v1352, %v679
        %v1354 = vadd.f32 %v1353, 1e-05
        %v1355 = vrsqrt.pop %v1354
        %v1356 = vmul.f32 %v1348, %v1355
        %v1357 = vlaneseq
        %v1358 = vshrl.u32 %v1357, 7
        %v1359 = vsub.s32 6, %v1358
        %v1360 = vrot.slane %v883, %v1359
        %v1361 = vmul.f32 %v1356, %v1360
        %v1362 = vlaneseq
        %v1363 = vshrl.u32 %v1362, 7
        %v1364 = vsub.s32 7, %v1363
        %v1365 = vrot.slane %v883, %v1364
        %v1366 = vadd.f32 %v1361, %v1365
        %1367 = vst.msk [vmem:[%s324] sm:$0xff] %vm387, %v1366
        %s1368 = sand.u32 %s164, 1
        %s1369 = scalar_lea.sflag [#allocation4], %s1368
        %s1370 = sand.u32 %s164, 1
        %s1371 = smul.addr %s1370, 8
        %s1372 = scalar_lea.vmem [#allocation11], %s1371
        // Predicated region
        $region65: #{_lambda_.1} parent=43 // pred_check
          %p1373 = pneg %p174
        $region66: #{_lambda_.1} parent=43 // pred_check_branch
          %1375 = sbr.rel (%p1373) target = $region68
        $region67: #{_lambda_.1} parent=43 // pred_region
          %s1377 = ssub.s32 128, 128
          %1378 = vsyncadd %s1369, %s1377
          %s1379 = smul.addr %s25, 128
          %s1380 = scalar_lea.hbm %s6, %s1379
          %s1382 = sshll.u32 %s1372, 4
          %s1383 = int_to_ptr.vmem [resolvable:$true] %s1382
          %1385 = dma.vmem_to_hbm [thread:$0]  %s1383, 128, %s1380, %s1369
        $region68: #{_lambda_.1} parent=43 // pred_fallthru
          _
      $region44: #{_lambda_.1} parent=5 // pred_fallthru
        _
      %p1386 = scmp.le.s32.totalorder 2, %s20
      // Predicated region
      $region69: #{_lambda_.1} parent=5 // pred_check
        %p1387 = pneg %p1386
      $region70: #{_lambda_.1} parent=5 // pred_check_branch
        %1389 = sbr.rel (%p1387) target = $region72
      $region71: #{_lambda_.1} parent=5 // pred_region
        %s1390 = ssub.s32 %s20, 2
        // Predicated region
        $region73: #{_lambda_.1} parent=71 // pred_check
          %p1391 = pneg %p180
        $region74: #{_lambda_.1} parent=71 // pred_check_branch
          %1393 = sbr.rel (%p1391) target = $region76
        $region75: #{_lambda_.1} parent=71 // pred_region
          %s1394 = sand.u32 %s165, 1
          %s1395 = scalar_lea.sflag [#allocation4], %s1394
          %s1396 = sand.u32 %s165, 1
          %s1397 = smul.addr %s1396, 8
          %s1398 = scalar_lea.vmem [#allocation11], %s1397
          %1399 = dma.done %s1395, 128
        $region76: #{_lambda_.1} parent=71 // pred_fallthru
          _
      $region72: #{_lambda_.1} parent=5 // pred_fallthru
        _
    $region6: #{_lambda_.1} parent=1 // loop_footer
      %s24 = sadd.s32 1, %s20
    $region7: #{_lambda_.1} parent=1 // loop_footer_branch
      %19 = sbr.rel target = $region3
    $region8: #{_lambda_.1} parent=1 // loop_exit
      _
    %1400 = vsyncpa [#allocation3], 1
    %s1401 = scalar_lea.sflag [#allocation3], 1
    %1402 = vsyncpa %s1401, 1
    %1403 = vsyncpa [#allocation6], 1
    %1404 = vsyncpa [#allocation9], 1
    %1405 = vsyncpa [#allocation4], 1
    %s1406 = scalar_lea.sflag [#allocation4], 1
    %1407 = vsyncpa %s1406, 1

</llo_original>
